<compile_context>
chip_gen: v7x
topology: tpu7x:2x2x1
jax: 0.10.0
libtpu: 0.0.40
codegen_flags: <defaults>
</compile_context>

<pallas_src>
import math
from functools import partial

import jax
import jax.numpy as jnp
from jax.experimental import pallas as pl
from jax.experimental.pallas import tpu as pltpu


# -----------------------------------------------------------------------------
# Fused kernel: one grid step == one batch element, all heads.
# -----------------------------------------------------------------------------
def _graphormer_kernel(h_ref, enc_ref, wemb_ref, wqkv_ref, bqkv_ref,
                       adj_ref, sp_ref, perm_ref, out_ref, attn_ref,
                       *, n_heads, dk, scale):
    # ---- node embedding + residual add (fused; weights stay VMEM-resident) ----
    node_enc = jnp.dot(enc_ref[...], wemb_ref[...],
                       preferred_element_type=jnp.float32)           # (n_n, in_f)
    x = h_ref[0] + node_enc                                          # (n_n, in_f)

    # ---- fused q/k/v projection for all heads: one wide matmul ----
    qkv = (jnp.dot(x, wqkv_ref[...], preferred_element_type=jnp.float32)
           + bqkv_ref[...])                                          # (n_n, 3*nh*dk)

    d_model = n_heads * dk
    sp = sp_ref[...]                                                 # diag zeroed in wrapper
    masked = adj_ref[0] == 0.0                                       # hoisted out of head loop
    n_n = sp.shape[0]

    out = jnp.zeros((n_n, d_model), dtype=jnp.float32)
    for hh in range(n_heads):                                        # static unroll
        q_h = qkv[:, hh * dk:(hh + 1) * dk]
        k_h = qkv[:, d_model + hh * dk:d_model + (hh + 1) * dk]
        v_h = qkv[:, 2 * d_model + hh * dk:2 * d_model + (hh + 1) * dk]

        # contract on the dk axis directly (no materialized k.T)
        s = jax.lax.dot_general(q_h, k_h, (((1,), (1,)), ((), ())),
                                preferred_element_type=jnp.float32) / scale
        s = s + sp
        s = jnp.where(masked, -1e10, s)

        m = jnp.max(s, axis=-1, keepdims=True)
        e = jnp.exp(s - m)
        a = e / jnp.sum(e, axis=-1, keepdims=True)                   # exact softmax
        attn_ref[0, hh] = a                                          # (n_n, n_n)

        o_h = jnp.dot(a, v_h, preferred_element_type=jnp.float32)    # (n_n, dk)
        # scatter this head's dk columns into the dk-major interleaved layout
        out = out + jnp.dot(o_h, perm_ref[hh * dk:(hh + 1) * dk, :],
                            preferred_element_type=jnp.float32)

    out_ref[0] = out                                                 # lane-dense (n_n, nh*dk)


# -----------------------------------------------------------------------------
# Wrapper (parameter plumbing / embedding gather kept as glue outside the kernel)
# -----------------------------------------------------------------------------
def graphormer_forward(h, adj, params):
    bs, n_n, in_f = h.shape
    n_heads, dk = params["n_heads"], params["dk"]
    d_model = n_heads * dk
    scale = math.sqrt(dk)

    enc = params["enc_features"].astype(jnp.float32)                 # (n_n, enc_dim)
    wemb = params["w_emb"]                                           # (enc_dim, in_f)
    enc_dim = enc.shape[1]

    # one-time weight/bias concatenation: column (h*dk + d) of each block = w[h,:,d]
    def flat_w(w):                                                   # (nh,in_f,dk)->(in_f,nh*dk)
        return jnp.transpose(w, (1, 0, 2)).reshape(in_f, d_model)

    def flat_b(b):                                                   # (nh,1,dk)->(nh*dk,)
        return b.reshape(d_model)

    wqkv = jnp.concatenate([flat_w(params["wq"]), flat_w(params["wk"]),
                            flat_w(params["wv"])], axis=1)           # (in_f, 3*d_model)
    bqkv = jnp.concatenate([flat_b(params["bq"]), flat_b(params["bk"]),
                            flat_b(params["bv"])]).reshape(1, 3 * d_model)

    # spatial encoding: tiny embedding gather + diagonal zeroing, hoisted out of kernel
    # TODO(synk): embedding-table gather stays in plain JAX glue (table is (max_hops+1,))
    sp = jnp.take(params["sp_table"], params["dist"], axis=0).astype(jnp.float32)
    sp = sp * (1.0 - jnp.eye(n_n, dtype=jnp.float32))

    # permutation matrix realizing torch's permute(0,2,3,1).reshape head interleave
    src = jnp.arange(d_model)
    dst = (src % dk) * n_heads + (src // dk)
    perm = jnp.zeros((d_model, d_model), jnp.float32).at[src, dst].set(1.0)

    out, attn = pl.pallas_call(
        partial(_graphormer_kernel, n_heads=n_heads, dk=dk, scale=scale),
        out_shape=(
            jax.ShapeDtypeStruct((bs, n_n, d_model), jnp.float32),
            jax.ShapeDtypeStruct((bs, n_heads, n_n, n_n), jnp.float32),
        ),
        grid=(bs,),
        in_specs=[
            pl.BlockSpec((1, n_n, in_f), lambda b: (b, 0, 0)),        # h
            pl.BlockSpec((n_n, enc_dim), lambda b: (0, 0)),           # enc_features
            pl.BlockSpec((enc_dim, in_f), lambda b: (0, 0)),          # w_emb
            pl.BlockSpec((in_f, 3 * d_model), lambda b: (0, 0)),      # fused Wqkv
            pl.BlockSpec((1, 3 * d_model), lambda b: (0, 0)),         # fused bias
            pl.BlockSpec((1, n_n, n_n), lambda b: (b, 0, 0)),         # adj
            pl.BlockSpec((n_n, n_n), lambda b: (0, 0)),               # spatial enc
            pl.BlockSpec((d_model, d_model), lambda b: (0, 0)),       # head-interleave perm
        ],
        out_specs=(
            pl.BlockSpec((1, n_n, d_model), lambda b: (b, 0, 0)),
            pl.BlockSpec((1, n_heads, n_n, n_n), lambda b: (b, 0, 0, 0)),
        ),
        compiler_params=pltpu.CompilerParams(
            dimension_semantics=("parallel",)),                       # bs>=2 keeps both v7x TCs busy
    )(h, enc, wemb, wqkv, bqkv, adj, sp, perm)

    return out, attn


# -----------------------------------------------------------------------------
# Pure-JAX reference (for correctness check)
# -----------------------------------------------------------------------------
def graphormer_reference(h, adj, params):
    bs, n_n, in_f = h.shape
    n_heads, dk = params["n_heads"], params["dk"]
    x = h + params["enc_features"] @ params["w_emb"]
    sp = jnp.take(params["sp_table"], params["dist"], axis=0)
    sp = sp * (1.0 - jnp.eye(n_n, dtype=jnp.float32))

    def proj(w, b):                                 # (n_heads, in_f, dk) -> (bs,nh,n,dk)
        y = jnp.einsum("bni,hid->bhnd", x, w) + b[:, 0][None, :, None, :]
        return y

    q = proj(params["wq"], params["bq"])
    k = proj(params["wk"], params["bk"])
    v = proj(params["wv"], params["bv"])
    scores = jnp.einsum("bhnd,bhmd->bhnm", q, k) / math.sqrt(dk)
    scores = scores + sp[None, None]
    scores = jnp.where(adj[:, None] == 0.0, -1e10, scores)
    attn = jax.nn.softmax(scores, axis=-1)
    out_h = jnp.einsum("bhnm,bhmd->bhnd", attn, v)
    out = jnp.transpose(out_h, (0, 2, 3, 1)).reshape(bs, n_n, n_heads * dk)
    return out, attn


# -----------------------------------------------------------------------------
# Deterministic parameter / input construction
# -----------------------------------------------------------------------------
def build_params(key, *, n_nodes, node_feat, n_edge_feat, in_features,
                 out_features, n_heads, max_hops):
    assert out_features % n_heads == 0
    dk = out_features // n_heads
    keys = jax.random.split(key, 13)

    node_features = jax.random.normal(keys[0], (n_nodes, node_feat), jnp.float32)
    in_deg = jax.random.randint(keys[1], (n_nodes,), 0, 4).astype(jnp.float32)
    out_deg = jax.random.randint(keys[2], (n_nodes,), 0, 4).astype(jnp.float32)
    edge_features = jax.random.normal(keys[3], (n_nodes, n_nodes, n_edge_feat),
                                      jnp.float32)
    dist = jax.random.randint(keys[4], (n_nodes, n_nodes), 0, max_hops + 1)
    dist = dist * (1 - jnp.eye(n_nodes, dtype=jnp.int32))          # zero diagonal hops

    enc_features = jnp.concatenate(
        [node_features, in_deg[:, None], out_deg[:, None],
         edge_features.reshape(n_nodes, n_nodes * n_edge_feat)], axis=1)
    enc_dim = enc_features.shape[1]

    # nn.Linear(enc_dim, in_features, bias=False) — kaiming-uniform-ish
    lim = 1.0 / math.sqrt(enc_dim)
    w_emb = jax.random.uniform(keys[5], (enc_dim, in_features), jnp.float32,
                               -lim, lim)

    # nn.Embedding(max_hops+1, 1) — standard normal
    sp_table = jax.random.normal(keys[6], (max_hops + 1,), jnp.float32)

    # q/k/v: xavier_uniform with gain 1/sqrt(2); stored (n_heads, in_f, dk)
    gain = 1.0 / math.sqrt(2.0)
    bound_w = gain * math.sqrt(6.0 / (in_features + out_features))
    bound_b = 1.0 / math.sqrt(in_features)

    def make_wb(kw, kb):
        w = jax.random.uniform(kw, (in_features, out_features), jnp.float32,
                               -bound_w, bound_w)
        w = w.reshape(in_features, n_heads, dk).transpose(1, 0, 2)  # (nh,in,dk)
        b = jax.random.uniform(kb, (out_features,), jnp.float32, -bound_b, bound_b)
        b = b.reshape(n_heads, 1, dk)
        return w, b

    wk, bk = make_wb(keys[7], keys[8])
    wq, bq = make_wb(keys[9], keys[10])
    wv, bv = make_wb(keys[11], keys[12])

    return dict(enc_features=enc_features, w_emb=w_emb, sp_table=sp_table,
                dist=dist, wq=wq, bq=bq, wk=wk, bk=bk, wv=wv, bv=bv,
                n_heads=n_heads, dk=dk)


if __name__ == "__main__":
    bs, n_nodes = 2, 8
    node_feat, n_edge_feat = 6, 3
    in_features, out_features, n_heads = 32, 32, 4
    max_hops = 4

    key = jax.random.PRNGKey(0)
    k_h, k_adj, k_p = jax.random.split(key, 3)

    params = build_params(k_p, n_nodes=n_nodes, node_feat=node_feat,
                          n_edge_feat=n_edge_feat, in_features=in_features,
                          out_features=out_features, n_heads=n_heads,
                          max_hops=max_hops)

    h = jax.random.normal(k_h, (bs, n_nodes, in_features), jnp.float32)
    adj = (jax.random.uniform(k_adj, (bs, n_nodes, n_nodes)) > 0.4).astype(jnp.float32)
    adj = jnp.maximum(adj, jnp.eye(n_nodes, dtype=jnp.float32)[None])  # self-loops

    out, attn = graphormer_forward(h, adj, params)
    out, attn = jax.block_until_ready((out, attn))

    out_ref, attn_ref = graphormer_reference(h, adj, params)
    assert out.shape == (bs, n_nodes, out_features)
    assert attn.shape == (bs, n_heads, n_nodes, n_nodes)
    assert jnp.allclose(out, out_ref, atol=1e-4, rtol=1e-4)
    assert jnp.allclose(attn, attn_ref, atol=1e-5, rtol=1e-4)

    print("KERNEL_OK")
</pallas_src>

<mosaic_0001>
module attributes {stable_mosaic.version = 11 : i64} {
  func.func @_graphormer_kernel(%arg0: i32, %arg1: memref<1x8x32xf32, #tpu.memory_space<vmem>>, %arg2: memref<8x32xf32, #tpu.memory_space<vmem>>, %arg3: memref<32x32xf32, #tpu.memory_space<vmem>>, %arg4: memref<32x96xf32, #tpu.memory_space<vmem>>, %arg5: memref<1x96xf32, #tpu.memory_space<vmem>>, %arg6: memref<1x8x8xf32, #tpu.memory_space<vmem>>, %arg7: memref<8x8xf32, #tpu.memory_space<vmem>>, %arg8: memref<32x32xf32, #tpu.memory_space<vmem>>, %arg9: memref<1x8x32xf32, #tpu.memory_space<vmem>>, %arg10: memref<1x4x8x8xf32, #tpu.memory_space<vmem>>) attributes {dimension_semantics = [#tpu.dimension_semantics<parallel>], iteration_bounds = array<i64: 2>, scalar_prefetch = 0 : i64, scratch_operands = 0 : i64, tpu.core_type = #tpu.core_type<tc>, window_params = [{transform_indices = @transform_0, window_bounds = array<i64: 1, 8, 32>}, {pipeline_mode = #tpu.pipeline_mode<synchronous>, transform_indices = @transform_1, window_bounds = array<i64: 8, 32>}, {pipeline_mode = #tpu.pipeline_mode<synchronous>, transform_indices = @transform_2, window_bounds = array<i64: 32, 32>}, {pipeline_mode = #tpu.pipeline_mode<synchronous>, transform_indices = @transform_3, window_bounds = array<i64: 32, 96>}, {pipeline_mode = #tpu.pipeline_mode<synchronous>, transform_indices = @transform_4, window_bounds = array<i64: 1, 96>}, {transform_indices = @transform_5, window_bounds = array<i64: 1, 8, 8>}, {pipeline_mode = #tpu.pipeline_mode<synchronous>, transform_indices = @transform_6, window_bounds = array<i64: 8, 8>}, {pipeline_mode = #tpu.pipeline_mode<synchronous>, transform_indices = @transform_7, window_bounds = array<i64: 32, 32>}, {transform_indices = @transform_8, window_bounds = array<i64: 1, 8, 32>}, {transform_indices = @transform_9, window_bounds = array<i64: 1, 4, 8, 8>}]} {
    %c0 = arith.constant 0 : index
    %c0_0 = arith.constant 0 : index
    %0 = vector.load %arg2[%c0, %c0_0] : memref<8x32xf32, #tpu.memory_space<vmem>>, vector<8x32xf32>
    %c0_1 = arith.constant 0 : index
    %c0_2 = arith.constant 0 : index
    %1 = vector.load %arg3[%c0_1, %c0_2] : memref<32x32xf32, #tpu.memory_space<vmem>>, vector<32x32xf32>
    %cst = arith.constant dense<0.000000e+00> : vector<8x32xf32>
    %2 = tpu.matmul %0, %1, %cst {dimension_numbers = #tpu.dot_dimension_numbers<[1], [0], [0], [1], [0, 0, 1, 1], [], []>} : vector<8x32xf32>, vector<32x32xf32>, vector<8x32xf32> -> vector<8x32xf32>
    %c0_3 = arith.constant 0 : index
    %c0_4 = arith.constant 0 : index
    %c0_5 = arith.constant 0 : index
    %3 = vector.load %arg1[%c0_3, %c0_4, %c0_5] : memref<1x8x32xf32, #tpu.memory_space<vmem>>, vector<1x8x32xf32>
    %4 = vector.shape_cast %3 : vector<1x8x32xf32> to vector<8x32xf32>
    %5 = arith.addf %4, %2 : vector<8x32xf32>
    %c0_6 = arith.constant 0 : index
    %c0_7 = arith.constant 0 : index
    %6 = vector.load %arg4[%c0_6, %c0_7] : memref<32x96xf32, #tpu.memory_space<vmem>>, vector<32x96xf32>
    %cst_8 = arith.constant dense<0.000000e+00> : vector<8x96xf32>
    %7 = tpu.matmul %5, %6, %cst_8 {dimension_numbers = #tpu.dot_dimension_numbers<[1], [0], [0], [1], [0, 0, 1, 1], [], []>} : vector<8x32xf32>, vector<32x96xf32>, vector<8x96xf32> -> vector<8x96xf32>
    %c0_9 = arith.constant 0 : index
    %c0_10 = arith.constant 0 : index
    %8 = vector.load %arg5[%c0_9, %c0_10] : memref<1x96xf32, #tpu.memory_space<vmem>>, vector<1x96xf32>
    %9 = vector.broadcast %8 : vector<1x96xf32> to vector<8x96xf32>
    %10 = arith.addf %7, %9 : vector<8x96xf32>
    %c0_11 = arith.constant 0 : index
    %c0_12 = arith.constant 0 : index
    %11 = vector.load %arg7[%c0_11, %c0_12] : memref<8x8xf32, #tpu.memory_space<vmem>>, vector<8x8xf32>
    %c0_13 = arith.constant 0 : index
    %c0_14 = arith.constant 0 : index
    %c0_15 = arith.constant 0 : index
    %12 = vector.load %arg6[%c0_13, %c0_14, %c0_15] : memref<1x8x8xf32, #tpu.memory_space<vmem>>, vector<1x8x8xf32>
    %13 = vector.shape_cast %12 : vector<1x8x8xf32> to vector<8x8xf32>
    %cst_16 = arith.constant 0.000000e+00 : f32
    %14 = vector.broadcast %cst_16 : f32 to vector<8x8xf32>
    %15 = arith.cmpf oeq, %13, %14 : vector<8x8xf32>
    %cst_17 = arith.constant 0.000000e+00 : f32
    %16 = vector.broadcast %cst_17 : f32 to vector<8x32xf32>
    %17 = vector.extract_strided_slice %10 {offsets = [0, 0], sizes = [8, 8], strides = [1, 1]} : vector<8x96xf32> to vector<8x8xf32>
    %18 = vector.extract_strided_slice %10 {offsets = [0, 32], sizes = [8, 8], strides = [1, 1]} : vector<8x96xf32> to vector<8x8xf32>
    %19 = vector.extract_strided_slice %10 {offsets = [0, 64], sizes = [8, 8], strides = [1, 1]} : vector<8x96xf32> to vector<8x8xf32>
    %cst_18 = arith.constant dense<0.000000e+00> : vector<8x8xf32>
    %20 = tpu.matmul %17, %18, %cst_18 {dimension_numbers = #tpu.dot_dimension_numbers<[1], [1], [0], [0], [0, 0, 1, 0], [], []>} : vector<8x8xf32>, vector<8x8xf32>, vector<8x8xf32> -> vector<8x8xf32>
    %cst_19 = arith.constant 2.82842708 : f32
    %21 = vector.broadcast %cst_19 : f32 to vector<8x8xf32>
    %22 = arith.divf %20, %21 : vector<8x8xf32>
    %23 = arith.addf %22, %11 : vector<8x8xf32>
    %cst_20 = arith.constant -1.000000e+10 : f32
    %24 = vector.broadcast %cst_20 : f32 to vector<8x8xf32>
    %25 = arith.select %15, %24, %23 : vector<8x8xi1>, vector<8x8xf32>
    %cst_21 = arith.constant dense<0xFF800000> : vector<8xf32>
    %26 = vector.multi_reduction <maximumf>, %25, %cst_21 [1] : vector<8x8xf32> to vector<8xf32>
    %27 = vector.shape_cast %26 : vector<8xf32> to vector<8x1xf32>
    %28 = vector.broadcast %27 : vector<8x1xf32> to vector<8x8xf32>
    %29 = arith.subf %25, %28 : vector<8x8xf32>
    %30 = math.exp %29 : vector<8x8xf32>
    %cst_22 = arith.constant dense<0.000000e+00> : vector<8xf32>
    %31 = vector.multi_reduction <add>, %30, %cst_22 [1] : vector<8x8xf32> to vector<8xf32>
    %32 = vector.shape_cast %31 : vector<8xf32> to vector<8x1xf32>
    %33 = vector.broadcast %32 : vector<8x1xf32> to vector<8x8xf32>
    %34 = arith.divf %30, %33 : vector<8x8xf32>
    %c0_23 = arith.constant 0 : index
    %c0_24 = arith.constant 0 : index
    %c0_25 = arith.constant 0 : index
    %c0_26 = arith.constant 0 : index
    %35 = vector.load %arg10[%c0_23, %c0_24, %c0_25, %c0_26] : memref<1x4x8x8xf32, #tpu.memory_space<vmem>>, vector<1x1x8x8xf32>
    %36 = vector.shape_cast %35 : vector<1x1x8x8xf32> to vector<8x8xf32>
    %37 = vector.shape_cast %34 : vector<8x8xf32> to vector<1x1x8x8xf32>
    tpu.vector_store %arg10[%c0_23, %c0_24, %c0_25, %c0_26], %37 {strides = array<i32>} : memref<1x4x8x8xf32, #tpu.memory_space<vmem>>, vector<1x1x8x8xf32>,
    %cst_27 = arith.constant dense<0.000000e+00> : vector<8x8xf32>
    %38 = tpu.matmul %34, %19, %cst_27 {dimension_numbers = #tpu.dot_dimension_numbers<[1], [0], [0], [1], [0, 0, 1, 1], [], []>} : vector<8x8xf32>, vector<8x8xf32>, vector<8x8xf32> -> vector<8x8xf32>
    %c0_28 = arith.constant 0 : index
    %c0_29 = arith.constant 0 : index
    %39 = vector.load %arg8[%c0_28, %c0_29] : memref<32x32xf32, #tpu.memory_space<vmem>>, vector<8x32xf32>
    %cst_30 = arith.constant dense<0.000000e+00> : vector<8x32xf32>
    %40 = tpu.matmul %38, %39, %cst_30 {dimension_numbers = #tpu.dot_dimension_numbers<[1], [0], [0], [1], [0, 0, 1, 1], [], []>} : vector<8x8xf32>, vector<8x32xf32>, vector<8x32xf32> -> vector<8x32xf32>
    %41 = arith.addf %16, %40 : vector<8x32xf32>
    %42 = vector.extract_strided_slice %10 {offsets = [0, 8], sizes = [8, 8], strides = [1, 1]} : vector<8x96xf32> to vector<8x8xf32>
    %43 = vector.extract_strided_slice %10 {offsets = [0, 40], sizes = [8, 8], strides = [1, 1]} : vector<8x96xf32> to vector<8x8xf32>
    %44 = vector.extract_strided_slice %10 {offsets = [0, 72], sizes = [8, 8], strides = [1, 1]} : vector<8x96xf32> to vector<8x8xf32>
    %cst_31 = arith.constant dense<0.000000e+00> : vector<8x8xf32>
    %45 = tpu.matmul %42, %43, %cst_31 {dimension_numbers = #tpu.dot_dimension_numbers<[1], [1], [0], [0], [0, 0, 1, 0], [], []>} : vector<8x8xf32>, vector<8x8xf32>, vector<8x8xf32> -> vector<8x8xf32>
    %cst_32 = arith.constant 2.82842708 : f32
    %46 = vector.broadcast %cst_32 : f32 to vector<8x8xf32>
    %47 = arith.divf %45, %46 : vector<8x8xf32>
    %48 = arith.addf %47, %11 : vector<8x8xf32>
    %cst_33 = arith.constant -1.000000e+10 : f32
    %49 = vector.broadcast %cst_33 : f32 to vector<8x8xf32>
    %50 = arith.select %15, %49, %48 : vector<8x8xi1>, vector<8x8xf32>
    %cst_34 = arith.constant dense<0xFF800000> : vector<8xf32>
    %51 = vector.multi_reduction <maximumf>, %50, %cst_34 [1] : vector<8x8xf32> to vector<8xf32>
    %52 = vector.shape_cast %51 : vector<8xf32> to vector<8x1xf32>
    %53 = vector.broadcast %52 : vector<8x1xf32> to vector<8x8xf32>
    %54 = arith.subf %50, %53 : vector<8x8xf32>
    %55 = math.exp %54 : vector<8x8xf32>
    %cst_35 = arith.constant dense<0.000000e+00> : vector<8xf32>
    %56 = vector.multi_reduction <add>, %55, %cst_35 [1] : vector<8x8xf32> to vector<8xf32>
    %57 = vector.shape_cast %56 : vector<8xf32> to vector<8x1xf32>
    %58 = vector.broadcast %57 : vector<8x1xf32> to vector<8x8xf32>
    %59 = arith.divf %55, %58 : vector<8x8xf32>
    %c0_36 = arith.constant 0 : index
    %c1 = arith.constant 1 : index
    %c0_37 = arith.constant 0 : index
    %c0_38 = arith.constant 0 : index
    %60 = vector.load %arg10[%c0_36, %c1, %c0_37, %c0_38] : memref<1x4x8x8xf32, #tpu.memory_space<vmem>>, vector<1x1x8x8xf32>
    %61 = vector.shape_cast %60 : vector<1x1x8x8xf32> to vector<8x8xf32>
    %62 = vector.shape_cast %59 : vector<8x8xf32> to vector<1x1x8x8xf32>
    tpu.vector_store %arg10[%c0_36, %c1, %c0_37, %c0_38], %62 {strides = array<i32>} : memref<1x4x8x8xf32, #tpu.memory_space<vmem>>, vector<1x1x8x8xf32>,
    %cst_39 = arith.constant dense<0.000000e+00> : vector<8x8xf32>
    %63 = tpu.matmul %59, %44, %cst_39 {dimension_numbers = #tpu.dot_dimension_numbers<[1], [0], [0], [1], [0, 0, 1, 1], [], []>} : vector<8x8xf32>, vector<8x8xf32>, vector<8x8xf32> -> vector<8x8xf32>
    %c8 = arith.constant 8 : index
    %c0_40 = arith.constant 0 : index
    %64 = vector.load %arg8[%c8, %c0_40] : memref<32x32xf32, #tpu.memory_space<vmem>>, vector<8x32xf32>
    %cst_41 = arith.constant dense<0.000000e+00> : vector<8x32xf32>
    %65 = tpu.matmul %63, %64, %cst_41 {dimension_numbers = #tpu.dot_dimension_numbers<[1], [0], [0], [1], [0, 0, 1, 1], [], []>} : vector<8x8xf32>, vector<8x32xf32>, vector<8x32xf32> -> vector<8x32xf32>
    %66 = arith.addf %41, %65 : vector<8x32xf32>
    %67 = vector.extract_strided_slice %10 {offsets = [0, 16], sizes = [8, 8], strides = [1, 1]} : vector<8x96xf32> to vector<8x8xf32>
    %68 = vector.extract_strided_slice %10 {offsets = [0, 48], sizes = [8, 8], strides = [1, 1]} : vector<8x96xf32> to vector<8x8xf32>
    %69 = vector.extract_strided_slice %10 {offsets = [0, 80], sizes = [8, 8], strides = [1, 1]} : vector<8x96xf32> to vector<8x8xf32>
    %cst_42 = arith.constant dense<0.000000e+00> : vector<8x8xf32>
    %70 = tpu.matmul %67, %68, %cst_42 {dimension_numbers = #tpu.dot_dimension_numbers<[1], [1], [0], [0], [0, 0, 1, 0], [], []>} : vector<8x8xf32>, vector<8x8xf32>, vector<8x8xf32> -> vector<8x8xf32>
    %cst_43 = arith.constant 2.82842708 : f32
    %71 = vector.broadcast %cst_43 : f32 to vector<8x8xf32>
    %72 = arith.divf %70, %71 : vector<8x8xf32>
    %73 = arith.addf %72, %11 : vector<8x8xf32>
    %cst_44 = arith.constant -1.000000e+10 : f32
    %74 = vector.broadcast %cst_44 : f32 to vector<8x8xf32>
    %75 = arith.select %15, %74, %73 : vector<8x8xi1>, vector<8x8xf32>
    %cst_45 = arith.constant dense<0xFF800000> : vector<8xf32>
    %76 = vector.multi_reduction <maximumf>, %75, %cst_45 [1] : vector<8x8xf32> to vector<8xf32>
    %77 = vector.shape_cast %76 : vector<8xf32> to vector<8x1xf32>
    %78 = vector.broadcast %77 : vector<8x1xf32> to vector<8x8xf32>
    %79 = arith.subf %75, %78 : vector<8x8xf32>
    %80 = math.exp %79 : vector<8x8xf32>
    %cst_46 = arith.constant dense<0.000000e+00> : vector<8xf32>
    %81 = vector.multi_reduction <add>, %80, %cst_46 [1] : vector<8x8xf32> to vector<8xf32>
    %82 = vector.shape_cast %81 : vector<8xf32> to vector<8x1xf32>
    %83 = vector.broadcast %82 : vector<8x1xf32> to vector<8x8xf32>
    %84 = arith.divf %80, %83 : vector<8x8xf32>
    %c0_47 = arith.constant 0 : index
    %c2 = arith.constant 2 : index
    %c0_48 = arith.constant 0 : index
    %c0_49 = arith.constant 0 : index
    %85 = vector.load %arg10[%c0_47, %c2, %c0_48, %c0_49] : memref<1x4x8x8xf32, #tpu.memory_space<vmem>>, vector<1x1x8x8xf32>
    %86 = vector.shape_cast %85 : vector<1x1x8x8xf32> to vector<8x8xf32>
    %87 = vector.shape_cast %84 : vector<8x8xf32> to vector<1x1x8x8xf32>
    tpu.vector_store %arg10[%c0_47, %c2, %c0_48, %c0_49], %87 {strides = array<i32>} : memref<1x4x8x8xf32, #tpu.memory_space<vmem>>, vector<1x1x8x8xf32>,
    %cst_50 = arith.constant dense<0.000000e+00> : vector<8x8xf32>
    %88 = tpu.matmul %84, %69, %cst_50 {dimension_numbers = #tpu.dot_dimension_numbers<[1], [0], [0], [1], [0, 0, 1, 1], [], []>} : vector<8x8xf32>, vector<8x8xf32>, vector<8x8xf32> -> vector<8x8xf32>
    %c16 = arith.constant 16 : index
    %c0_51 = arith.constant 0 : index
    %89 = vector.load %arg8[%c16, %c0_51] : memref<32x32xf32, #tpu.memory_space<vmem>>, vector<8x32xf32>
    %cst_52 = arith.constant dense<0.000000e+00> : vector<8x32xf32>
    %90 = tpu.matmul %88, %89, %cst_52 {dimension_numbers = #tpu.dot_dimension_numbers<[1], [0], [0], [1], [0, 0, 1, 1], [], []>} : vector<8x8xf32>, vector<8x32xf32>, vector<8x32xf32> -> vector<8x32xf32>
    %91 = arith.addf %66, %90 : vector<8x32xf32>
    %92 = vector.extract_strided_slice %10 {offsets = [0, 24], sizes = [8, 8], strides = [1, 1]} : vector<8x96xf32> to vector<8x8xf32>
    %93 = vector.extract_strided_slice %10 {offsets = [0, 56], sizes = [8, 8], strides = [1, 1]} : vector<8x96xf32> to vector<8x8xf32>
    %94 = vector.extract_strided_slice %10 {offsets = [0, 88], sizes = [8, 8], strides = [1, 1]} : vector<8x96xf32> to vector<8x8xf32>
    %cst_53 = arith.constant dense<0.000000e+00> : vector<8x8xf32>
    %95 = tpu.matmul %92, %93, %cst_53 {dimension_numbers = #tpu.dot_dimension_numbers<[1], [1], [0], [0], [0, 0, 1, 0], [], []>} : vector<8x8xf32>, vector<8x8xf32>, vector<8x8xf32> -> vector<8x8xf32>
    %cst_54 = arith.constant 2.82842708 : f32
    %96 = vector.broadcast %cst_54 : f32 to vector<8x8xf32>
    %97 = arith.divf %95, %96 : vector<8x8xf32>
    %98 = arith.addf %97, %11 : vector<8x8xf32>
    %cst_55 = arith.constant -1.000000e+10 : f32
    %99 = vector.broadcast %cst_55 : f32 to vector<8x8xf32>
    %100 = arith.select %15, %99, %98 : vector<8x8xi1>, vector<8x8xf32>
    %cst_56 = arith.constant dense<0xFF800000> : vector<8xf32>
    %101 = vector.multi_reduction <maximumf>, %100, %cst_56 [1] : vector<8x8xf32> to vector<8xf32>
    %102 = vector.shape_cast %101 : vector<8xf32> to vector<8x1xf32>
    %103 = vector.broadcast %102 : vector<8x1xf32> to vector<8x8xf32>
    %104 = arith.subf %100, %103 : vector<8x8xf32>
    %105 = math.exp %104 : vector<8x8xf32>
    %cst_57 = arith.constant dense<0.000000e+00> : vector<8xf32>
    %106 = vector.multi_reduction <add>, %105, %cst_57 [1] : vector<8x8xf32> to vector<8xf32>
    %107 = vector.shape_cast %106 : vector<8xf32> to vector<8x1xf32>
    %108 = vector.broadcast %107 : vector<8x1xf32> to vector<8x8xf32>
    %109 = arith.divf %105, %108 : vector<8x8xf32>
    %c0_58 = arith.constant 0 : index
    %c3 = arith.constant 3 : index
    %c0_59 = arith.constant 0 : index
    %c0_60 = arith.constant 0 : index
    %110 = vector.load %arg10[%c0_58, %c3, %c0_59, %c0_60] : memref<1x4x8x8xf32, #tpu.memory_space<vmem>>, vector<1x1x8x8xf32>
    %111 = vector.shape_cast %110 : vector<1x1x8x8xf32> to vector<8x8xf32>
    %112 = vector.shape_cast %109 : vector<8x8xf32> to vector<1x1x8x8xf32>
    tpu.vector_store %arg10[%c0_58, %c3, %c0_59, %c0_60], %112 {strides = array<i32>} : memref<1x4x8x8xf32, #tpu.memory_space<vmem>>, vector<1x1x8x8xf32>,
    %cst_61 = arith.constant dense<0.000000e+00> : vector<8x8xf32>
    %113 = tpu.matmul %109, %94, %cst_61 {dimension_numbers = #tpu.dot_dimension_numbers<[1], [0], [0], [1], [0, 0, 1, 1], [], []>} : vector<8x8xf32>, vector<8x8xf32>, vector<8x8xf32> -> vector<8x8xf32>
    %c24 = arith.constant 24 : index
    %c0_62 = arith.constant 0 : index
    %114 = vector.load %arg8[%c24, %c0_62] : memref<32x32xf32, #tpu.memory_space<vmem>>, vector<8x32xf32>
    %cst_63 = arith.constant dense<0.000000e+00> : vector<8x32xf32>
    %115 = tpu.matmul %113, %114, %cst_63 {dimension_numbers = #tpu.dot_dimension_numbers<[1], [0], [0], [1], [0, 0, 1, 1], [], []>} : vector<8x8xf32>, vector<8x32xf32>, vector<8x32xf32> -> vector<8x32xf32>
    %116 = arith.addf %91, %115 : vector<8x32xf32>
    %c0_64 = arith.constant 0 : index
    %c0_65 = arith.constant 0 : index
    %c0_66 = arith.constant 0 : index
    %117 = vector.load %arg9[%c0_64, %c0_65, %c0_66] : memref<1x8x32xf32, #tpu.memory_space<vmem>>, vector<1x8x32xf32>
    %118 = vector.shape_cast %117 : vector<1x8x32xf32> to vector<8x32xf32>
    %119 = vector.shape_cast %116 : vector<8x32xf32> to vector<1x8x32xf32>
    tpu.vector_store %arg9[%c0_64, %c0_65, %c0_66], %119 {strides = array<i32>} : memref<1x8x32xf32, #tpu.memory_space<vmem>>, vector<1x8x32xf32>,
    return
  }
  func.func @transform_0(%arg0: i32) -> (i32, i32, i32) {
    %c0_i32 = arith.constant 0 : i32
    %c0_i32_0 = arith.constant 0 : i32
    %c0_i32_1 = arith.constant 0 : i32
    return %arg0, %c0_i32, %c0_i32_0 : i32, i32, i32
  }
  func.func @transform_1(%arg0: i32) -> (i32, i32) {
    %c0_i32 = arith.constant 0 : i32
    %c0_i32_0 = arith.constant 0 : i32
    %c0_i32_1 = arith.constant 0 : i32
    return %c0_i32, %c0_i32_0 : i32, i32
  }
  func.func @transform_2(%arg0: i32) -> (i32, i32) {
    %c0_i32 = arith.constant 0 : i32
    %c0_i32_0 = arith.constant 0 : i32
    %c0_i32_1 = arith.constant 0 : i32
    return %c0_i32, %c0_i32_0 : i32, i32
  }
  func.func @transform_3(%arg0: i32) -> (i32, i32) {
    %c0_i32 = arith.constant 0 : i32
    %c0_i32_0 = arith.constant 0 : i32
    %c0_i32_1 = arith.constant 0 : i32
    return %c0_i32, %c0_i32_0 : i32, i32
  }
  func.func @transform_4(%arg0: i32) -> (i32, i32) {
    %c0_i32 = arith.constant 0 : i32
    %c0_i32_0 = arith.constant 0 : i32
    %c0_i32_1 = arith.constant 0 : i32
    return %c0_i32, %c0_i32_0 : i32, i32
  }
  func.func @transform_5(%arg0: i32) -> (i32, i32, i32) {
    %c0_i32 = arith.constant 0 : i32
    %c0_i32_0 = arith.constant 0 : i32
    %c0_i32_1 = arith.constant 0 : i32
    return %arg0, %c0_i32, %c0_i32_0 : i32, i32, i32
  }
  func.func @transform_6(%arg0: i32) -> (i32, i32) {
    %c0_i32 = arith.constant 0 : i32
    %c0_i32_0 = arith.constant 0 : i32
    %c0_i32_1 = arith.constant 0 : i32
    return %c0_i32, %c0_i32_0 : i32, i32
  }
  func.func @transform_7(%arg0: i32) -> (i32, i32) {
    %c0_i32 = arith.constant 0 : i32
    %c0_i32_0 = arith.constant 0 : i32
    %c0_i32_1 = arith.constant 0 : i32
    return %c0_i32, %c0_i32_0 : i32, i32
  }
  func.func @transform_8(%arg0: i32) -> (i32, i32, i32) {
    %c0_i32 = arith.constant 0 : i32
    %c0_i32_0 = arith.constant 0 : i32
    %c0_i32_1 = arith.constant 0 : i32
    return %arg0, %c0_i32, %c0_i32_0 : i32, i32, i32
  }
  func.func @transform_9(%arg0: i32) -> (i32, i32, i32, i32) {
    %c0_i32 = arith.constant 0 : i32
    %c0_i32_0 = arith.constant 0 : i32
    %c0_i32_1 = arith.constant 0 : i32
    %c0_i32_2 = arith.constant 0 : i32
    return %arg0, %c0_i32, %c0_i32_0, %c0_i32_1 : i32, i32, i32, i32
  }
}

</mosaic_0001>

<llo_original>
// kernel: tpu_custom_call.1
$region0: #{tpu_custom_call.1}
  #allocation0 [shape = 'u32[]', space=smem, size = 0x4, offset = 0x4, fixed_abs, tag = 'smem constant byte address 0x4 - core index']
  #allocation1 [shape = 'u32[144,128]{1,0:T(1,128)}', space=vmem, size = 0x12000, scoped, tag = 'internal scratch']
  %s0 = inlined_call_operand.hbm [shape: f32[2,8,32], index: 0, kind: input, shape index: {}]
  %s1 = inlined_call_operand.hbm [shape: f32[8,32], index: 1, kind: input, shape index: {}]
  %s2 = inlined_call_operand.hbm [shape: f32[32,32], index: 2, kind: input, shape index: {}]
  %s3 = inlined_call_operand.hbm [shape: f32[32,96], index: 3, kind: input, shape index: {}]
  %s4 = inlined_call_operand.vmem [shape: f32[1,96], index: 4, kind: input, shape index: {}]
  %s5 = inlined_call_operand.vmem [shape: f32[2,8,8], index: 5, kind: input, shape index: {}]
  %s6 = inlined_call_operand.hbm [shape: f32[8,8], index: 6, kind: input, shape index: {}]
  %s7 = inlined_call_operand.hbm [shape: f32[32,32], index: 7, kind: input, shape index: {}]
  %s8 = inlined_call_operand.hbm [shape: f32[2,8,32], index: 8, kind: output, shape index: {0}]
  %s9 = inlined_call_operand.hbm [shape: f32[2,4,8,8], index: 9, kind: output, shape index: {1}]
  %10 = xla_tuple %s8, %s9
  %s11 = sld [smem:[#allocation0]]
  $region97: #{tpu_custom_call.1} parent=0
    _
  %s13 = ssub.s32 1, %s11
  %s14 = scalar_select 0, %s13, %s11
  $region1: #{tpu_custom_call.1} parent=0
    #allocation2 [shape = 'u8[8192]{0}', space=vmem, size = 0x2000, scoped, tag = 'input window, operand 0']
    #allocation3 [shape = 's32[2]{0}', space=sflag, size = 0x8, scoped, tag = 'scoped memory for tpu_custom_call.1']
    #allocation4 [shape = 's32[2]{0}', space=sflag, size = 0x8, scoped, tag = 'scoped memory for tpu_custom_call.1']
    #allocation5 [shape = 'u8[4096]{0}', space=vmem, size = 0x1000, scoped, tag = 'input window, operand 1, single buffered']
    #allocation6 [shape = 's32[1]{0}', space=sflag, size = 0x4, scoped, tag = 'scoped memory for tpu_custom_call.1']
    #allocation7 [shape = 'u8[16384]{0}', space=vmem, size = 0x4000, scoped, tag = 'input window, operand 2, single buffered']
    #allocation8 [shape = 'u8[16384]{0}', space=vmem, size = 0x4000, scoped, tag = 'input window, operand 3, single buffered']
    #allocation9 [shape = 's32[1]{0}', space=sflag, size = 0x4, scoped, tag = 'scoped memory for tpu_custom_call.1']
    #allocation10 [shape = 'u8[4096]{0}', space=vmem, size = 0x1000, scoped, tag = 'input window, operand 6, single buffered']
    #allocation11 [shape = 'u8[16384]{0}', space=vmem, size = 0x4000, scoped, tag = 'input window, operand 7, single buffered']
    #allocation12 [shape = 's32[1]{0}', space=sflag, size = 0x4, scoped, tag = 'scoped memory for tpu_custom_call.1']
    #allocation13 [shape = 'u8[8192]{0}', space=vmem, size = 0x2000, scoped, tag = 'output window, operand 0']
    #allocation14 [shape = 'u8[32768]{0}', space=vmem, size = 0x8000, scoped, tag = 'output window, operand 1']
    #allocation15 [shape = 's32[2]{0}', space=sflag, size = 0x8, scoped, tag = 'scoped memory for tpu_custom_call.1']
    %15 = vsyncpa [#allocation3], 0
    %s16 = scalar_lea.sflag [#allocation3], 1
    %17 = vsyncpa %s16, 0
    %18 = vsyncpa [#allocation6], 0
    %19 = vsyncpa [#allocation9], 0
    %20 = vsyncpa [#allocation12], 0
    %21 = vsyncpa [#allocation4], 0
    %s22 = scalar_lea.sflag [#allocation4], 1
    %23 = vsyncpa %s22, 0
    %24 = vsyncpa [#allocation15], 0
    %s25 = scalar_lea.sflag [#allocation15], 1
    %26 = vsyncpa %s25, 0
    loop: start=0, step=1, limit=4
    $region2: #{tpu_custom_call.1} parent=1 // loop_pre_header
      _
    $region3: #{tpu_custom_call.1} parent=1 // loop_header
      %s28 = sphi 0, %s32
      %p29 = scmp.ge.s32.totalorder %s28, 4
      %s38 = sphi 0, %s40
      %s41 = sphi 0, %s38
      %s42 = sphi 0, %s41
      %s58 = sphi 0, %s42
      %s62 = sphi 0, %s62
      %s64 = sphi 0, %s62
      %s65 = sphi 0, %s64
      %s79 = sphi 0, %s65
      %s83 = sphi 0, %s83
      %s85 = sphi 0, %s83
      %s86 = sphi 0, %s85
      %s100 = sphi 0, %s86
      %s104 = sphi 0, %s104
      %s106 = sphi 0, %s104
      %s107 = sphi 0, %s106
      %s121 = sphi 0, %s107
      %s125 = sphi 0, %s125
      %s127 = sphi 0, %s125
      %s128 = sphi 0, %s127
      %s142 = sphi 0, %s128
      %s148 = sphi 0, %s150
      %s151 = sphi 0, %s148
      %s152 = sphi 0, %s151
      %s168 = sphi 0, %s152
      %s172 = sphi 0, %s172
      %s174 = sphi 0, %s172
      %s175 = sphi 0, %s174
      %s189 = sphi 0, %s175
      %s193 = sphi 0, %s193
      %s195 = sphi 0, %s193
      %s196 = sphi 0, %s195
      %s210 = sphi 0, %s196
      %s216 = sphi 0, %s218
      %s219 = sphi 0, %s216
      %s220 = sphi 0, %s219
      %s236 = sphi 0, %s220
      %s242 = sphi 0, %s244
      %s245 = sphi 0, %s242
      %s246 = sphi 0, %s245
      %s262 = sphi 0, %s246
    $region4: #{tpu_custom_call.1} parent=1 // loop_header_branch
      %31 = sbr.rel (%p29) target = $region8
    $region5: #{tpu_custom_call.1} parent=1 // loop_body
      %s33 = ssub.s32 %s28, 1
      %s34 = ssub.s32 %s28, 2
      %s35 = sadd.s32 %s28, 1
      %s36 = ssub.s32 %s28, %s35
      %p37 = scmp.eq.s32.totalorder %s36, 0
      %s39 = sadd.s32 %s38, 1
      %s40 = scalar_select %p37, %s38, %s39
      %p43 = pneg %p37
      %p44 = scmp.eq.s32.totalorder %s28, 1
      %p45 = por %p43, %p44
      %p46 = scmp.ne.s32.totalorder %s38, %s41
      %p47 = scmp.eq.s32.totalorder %s28, 0
      %p48 = por %p46, %p47
      %p49 = scmp.ne.s32.totalorder %s38, %s41
      %p50 = scmp.eq.s32.totalorder %s33, 1
      %p51 = por %p49, %p50
      %p52 = scmp.ne.s32.totalorder %s41, %s42
      %p53 = scmp.eq.s32.totalorder %s33, 0
      %p54 = por %p52, %p53
      %p55 = scmp.ne.s32.totalorder %s41, %s42
      %p56 = scmp.eq.s32.totalorder %s34, 1
      %p57 = por %p55, %p56
      %p59 = scmp.ne.s32.totalorder %s42, %s58
      %p60 = scmp.eq.s32.totalorder %s34, 0
      %p61 = por %p59, %p60
      %s63 = sadd.s32 %s62, 1
      %p66 = scmp.eq.s32.totalorder %s28, 1
      %p67 = scmp.ne.s32.totalorder %s62, %s64
      %p68 = scmp.eq.s32.totalorder %s28, 0
      %p69 = por %p67, %p68
      %p70 = scmp.ne.s32.totalorder %s62, %s64
      %p71 = scmp.eq.s32.totalorder %s33, 1
      %p72 = por %p70, %p71
      %p73 = scmp.ne.s32.totalorder %s64, %s65
      %p74 = scmp.eq.s32.totalorder %s33, 0
      %p75 = por %p73, %p74
      %p76 = scmp.ne.s32.totalorder %s64, %s65
      %p77 = scmp.eq.s32.totalorder %s34, 1
      %p78 = por %p76, %p77
      %p80 = scmp.ne.s32.totalorder %s65, %s79
      %p81 = scmp.eq.s32.totalorder %s34, 0
      %p82 = por %p80, %p81
      %s84 = sadd.s32 %s83, 1
      %p87 = scmp.eq.s32.totalorder %s28, 1
      %p88 = scmp.ne.s32.totalorder %s83, %s85
      %p89 = scmp.eq.s32.totalorder %s28, 0
      %p90 = por %p88, %p89
      %p91 = scmp.ne.s32.totalorder %s83, %s85
      %p92 = scmp.eq.s32.totalorder %s33, 1
      %p93 = por %p91, %p92
      %p94 = scmp.ne.s32.totalorder %s85, %s86
      %p95 = scmp.eq.s32.totalorder %s33, 0
      %p96 = por %p94, %p95
      %p97 = scmp.ne.s32.totalorder %s85, %s86
      %p98 = scmp.eq.s32.totalorder %s34, 1
      %p99 = por %p97, %p98
      %p101 = scmp.ne.s32.totalorder %s86, %s100
      %p102 = scmp.eq.s32.totalorder %s34, 0
      %p103 = por %p101, %p102
      %s105 = sadd.s32 %s104, 1
      %p108 = scmp.eq.s32.totalorder %s28, 1
      %p109 = scmp.ne.s32.totalorder %s104, %s106
      %p110 = scmp.eq.s32.totalorder %s28, 0
      %p111 = por %p109, %p110
      %p112 = scmp.ne.s32.totalorder %s104, %s106
      %p113 = scmp.eq.s32.totalorder %s33, 1
      %p114 = por %p112, %p113
      %p115 = scmp.ne.s32.totalorder %s106, %s107
      %p116 = scmp.eq.s32.totalorder %s33, 0
      %p117 = por %p115, %p116
      %p118 = scmp.ne.s32.totalorder %s106, %s107
      %p119 = scmp.eq.s32.totalorder %s34, 1
      %p120 = por %p118, %p119
      %p122 = scmp.ne.s32.totalorder %s107, %s121
      %p123 = scmp.eq.s32.totalorder %s34, 0
      %p124 = por %p122, %p123
      %s126 = sadd.s32 %s125, 1
      %p129 = scmp.eq.s32.totalorder %s28, 1
      %p130 = scmp.ne.s32.totalorder %s125, %s127
      %p131 = scmp.eq.s32.totalorder %s28, 0
      %p132 = por %p130, %p131
      %p133 = scmp.ne.s32.totalorder %s125, %s127
      %p134 = scmp.eq.s32.totalorder %s33, 1
      %p135 = por %p133, %p134
      %p136 = scmp.ne.s32.totalorder %s127, %s128
      %p137 = scmp.eq.s32.totalorder %s33, 0
      %p138 = por %p136, %p137
      %p139 = scmp.ne.s32.totalorder %s127, %s128
      %p140 = scmp.eq.s32.totalorder %s34, 1
      %p141 = por %p139, %p140
      %p143 = scmp.ne.s32.totalorder %s128, %s142
      %p144 = scmp.eq.s32.totalorder %s34, 0
      %p145 = por %p143, %p144
      %s146 = ssub.s32 %s28, %s35
      %p147 = scmp.eq.s32.totalorder %s146, 0
      %s149 = sadd.s32 %s148, 1
      %s150 = scalar_select %p147, %s148, %s149
      %p153 = pneg %p147
      %p154 = scmp.eq.s32.totalorder %s28, 1
      %p155 = por %p153, %p154
      %p156 = scmp.ne.s32.totalorder %s148, %s151
      %p157 = scmp.eq.s32.totalorder %s28, 0
      %p158 = por %p156, %p157
      %p159 = scmp.ne.s32.totalorder %s148, %s151
      %p160 = scmp.eq.s32.totalorder %s33, 1
      %p161 = por %p159, %p160
      %p162 = scmp.ne.s32.totalorder %s151, %s152
      %p163 = scmp.eq.s32.totalorder %s33, 0
      %p164 = por %p162, %p163
      %p165 = scmp.ne.s32.totalorder %s151, %s152
      %p166 = scmp.eq.s32.totalorder %s34, 1
      %p167 = por %p165, %p166
      %p169 = scmp.ne.s32.totalorder %s152, %s168
      %p170 = scmp.eq.s32.totalorder %s34, 0
      %p171 = por %p169, %p170
      %s173 = sadd.s32 %s172, 1
      %p176 = scmp.eq.s32.totalorder %s28, 1
      %p177 = scmp.ne.s32.totalorder %s172, %s174
      %p178 = scmp.eq.s32.totalorder %s28, 0
      %p179 = por %p177, %p178
      %p180 = scmp.ne.s32.totalorder %s172, %s174
      %p181 = scmp.eq.s32.totalorder %s33, 1
      %p182 = por %p180, %p181
      %p183 = scmp.ne.s32.totalorder %s174, %s175
      %p184 = scmp.eq.s32.totalorder %s33, 0
      %p185 = por %p183, %p184
      %p186 = scmp.ne.s32.totalorder %s174, %s175
      %p187 = scmp.eq.s32.totalorder %s34, 1
      %p188 = por %p186, %p187
      %p190 = scmp.ne.s32.totalorder %s175, %s189
      %p191 = scmp.eq.s32.totalorder %s34, 0
      %p192 = por %p190, %p191
      %s194 = sadd.s32 %s193, 1
      %p197 = scmp.eq.s32.totalorder %s28, 1
      %p198 = scmp.ne.s32.totalorder %s193, %s195
      %p199 = scmp.eq.s32.totalorder %s28, 0
      %p200 = por %p198, %p199
      %p201 = scmp.ne.s32.totalorder %s193, %s195
      %p202 = scmp.eq.s32.totalorder %s33, 1
      %p203 = por %p201, %p202
      %p204 = scmp.ne.s32.totalorder %s195, %s196
      %p205 = scmp.eq.s32.totalorder %s33, 0
      %p206 = por %p204, %p205
      %p207 = scmp.ne.s32.totalorder %s195, %s196
      %p208 = scmp.eq.s32.totalorder %s34, 1
      %p209 = por %p207, %p208
      %p211 = scmp.ne.s32.totalorder %s196, %s210
      %p212 = scmp.eq.s32.totalorder %s34, 0
      %p213 = por %p211, %p212
      %s214 = ssub.s32 %s28, %s35
      %p215 = scmp.eq.s32.totalorder %s214, 0
      %s217 = sadd.s32 %s216, 1
      %s218 = scalar_select %p215, %s216, %s217
      %p221 = pneg %p215
      %p222 = scmp.eq.s32.totalorder %s28, 1
      %p223 = por %p221, %p222
      %p224 = scmp.ne.s32.totalorder %s216, %s219
      %p225 = scmp.eq.s32.totalorder %s28, 0
      %p226 = por %p224, %p225
      %p227 = scmp.ne.s32.totalorder %s216, %s219
      %p228 = scmp.eq.s32.totalorder %s33, 1
      %p229 = por %p227, %p228
      %p230 = scmp.ne.s32.totalorder %s219, %s220
      %p231 = scmp.eq.s32.totalorder %s33, 0
      %p232 = por %p230, %p231
      %p233 = scmp.ne.s32.totalorder %s219, %s220
      %p234 = scmp.eq.s32.totalorder %s34, 1
      %p235 = por %p233, %p234
      %p237 = scmp.ne.s32.totalorder %s220, %s236
      %p238 = scmp.eq.s32.totalorder %s34, 0
      %p239 = por %p237, %p238
      %s240 = ssub.s32 %s28, %s35
      %p241 = scmp.eq.s32.totalorder %s240, 0
      %s243 = sadd.s32 %s242, 1
      %s244 = scalar_select %p241, %s242, %s243
      %p247 = pneg %p241
      %p248 = scmp.eq.s32.totalorder %s28, 1
      %p249 = por %p247, %p248
      %p250 = scmp.ne.s32.totalorder %s242, %s245
      %p251 = scmp.eq.s32.totalorder %s28, 0
      %p252 = por %p250, %p251
      %p253 = scmp.ne.s32.totalorder %s242, %s245
      %p254 = scmp.eq.s32.totalorder %s33, 1
      %p255 = por %p253, %p254
      %p256 = scmp.ne.s32.totalorder %s245, %s246
      %p257 = scmp.eq.s32.totalorder %s33, 0
      %p258 = por %p256, %p257
      %p259 = scmp.ne.s32.totalorder %s245, %s246
      %p260 = scmp.eq.s32.totalorder %s34, 1
      %p261 = por %p259, %p260
      %p263 = scmp.ne.s32.totalorder %s246, %s262
      %p264 = scmp.eq.s32.totalorder %s34, 0
      %p265 = por %p263, %p264
      %p266 = scmp.le.s32.totalorder 1, %s28
      %p267 = scmp.lt.s32.totalorder %s28, 3
      %p268 = pnand %p266, %p267
      %p269 = pneg %p268
      // Predicated region
      $region9: #{tpu_custom_call.1} parent=5 // pred_check
        _
      $region10: #{tpu_custom_call.1} parent=5 // pred_check_branch
        %271 = sbr.rel (%p268) target = $region12
      $region11: #{tpu_custom_call.1} parent=5 // pred_region
        %s272 = ssub.s32 %s28, 1
        // Predicated region
        $region13: #{tpu_custom_call.1} parent=11 // pred_check
          %p273 = pneg %p75
        $region14: #{tpu_custom_call.1} parent=11 // pred_check_branch
          %275 = sbr.rel (%p273) target = $region16
        $region15: #{tpu_custom_call.1} parent=11 // pred_region
          %s277 = ssub.s32 128, 128
          %278 = vsyncadd [#allocation6], %s277
          %s280 = sshll.u32 [#allocation5], 4
          %s281 = int_to_ptr.vmem [resolvable:$true] %s280
          %283 = dma.hbm_to_vmem [thread:$0]  %s1, 128, %s281, [#allocation6]
        $region16: #{tpu_custom_call.1} parent=11 // pred_fallthru
          _
        // Predicated region
        $region17: #{tpu_custom_call.1} parent=11 // pred_check
          %p284 = pneg %p96
        $region18: #{tpu_custom_call.1} parent=11 // pred_check_branch
          %286 = sbr.rel (%p284) target = $region20
        $region19: #{tpu_custom_call.1} parent=11 // pred_region
          %s288 = ssub.s32 512, 512
          %289 = vsyncadd [#allocation6], %s288
          %s290 = sshll.u32 [#allocation7], 4
          %s291 = int_to_ptr.vmem [resolvable:$true] %s290
          %296 = dma.hbm_to_vmem [thread:$0]  %s2, 512, %s291, [#allocation6], 128, 128, 8
        $region20: #{tpu_custom_call.1} parent=11 // pred_fallthru
          _
        // Predicated region
        $region21: #{tpu_custom_call.1} parent=11 // pred_check
          %p297 = pneg %p117
        $region22: #{tpu_custom_call.1} parent=11 // pred_check_branch
          %299 = sbr.rel (%p297) target = $region24
        $region23: #{tpu_custom_call.1} parent=11 // pred_region
          %s301 = ssub.s32 512, 512
          %302 = vsyncadd [#allocation9], %s301
          %s303 = sshll.u32 [#allocation8], 4
          %s304 = int_to_ptr.vmem [resolvable:$true] %s303
          %309 = dma.hbm_to_vmem [thread:$0]  %s3, 512, %s304, [#allocation9], 128, 128, 8
        $region24: #{tpu_custom_call.1} parent=11 // pred_fallthru
          _
        // Predicated region
        $region25: #{tpu_custom_call.1} parent=11 // pred_check
          %p310 = pneg %p138
        $region26: #{tpu_custom_call.1} parent=11 // pred_check_branch
          %312 = sbr.rel (%p310) target = $region28
        $region27: #{tpu_custom_call.1} parent=11 // pred_region
          _
        $region28: #{tpu_custom_call.1} parent=11 // pred_fallthru
          _
        // Predicated region
        $region29: #{tpu_custom_call.1} parent=11 // pred_check
          %p313 = pneg %p185
        $region30: #{tpu_custom_call.1} parent=11 // pred_check_branch
          %315 = sbr.rel (%p313) target = $region32
        $region31: #{tpu_custom_call.1} parent=11 // pred_region
          %s317 = ssub.s32 128, 128
          %318 = vsyncadd [#allocation9], %s317
          %s320 = sshll.u32 [#allocation10], 4
          %s321 = int_to_ptr.vmem [resolvable:$true] %s320
          %323 = dma.hbm_to_vmem [thread:$0]  %s6, 128, %s321, [#allocation9]
        $region32: #{tpu_custom_call.1} parent=11 // pred_fallthru
          _
        // Predicated region
        $region33: #{tpu_custom_call.1} parent=11 // pred_check
          %p324 = pneg %p206
        $region34: #{tpu_custom_call.1} parent=11 // pred_check_branch
          %326 = sbr.rel (%p324) target = $region36
        $region35: #{tpu_custom_call.1} parent=11 // pred_region
          %s328 = ssub.s32 512, 512
          %329 = vsyncadd [#allocation12], %s328
          %s330 = sshll.u32 [#allocation11], 4
          %s331 = int_to_ptr.vmem [resolvable:$true] %s330
          %336 = dma.hbm_to_vmem [thread:$0]  %s7, 512, %s331, [#allocation12], 128, 128, 8
        $region36: #{tpu_custom_call.1} parent=11 // pred_fallthru
          _
      $region12: #{tpu_custom_call.1} parent=5 // pred_fallthru
        _
      %p337 = scmp.lt.s32.totalorder %s28, 2
      // Predicated region
      $region37: #{tpu_custom_call.1} parent=5 // pred_check
        %p338 = pneg %p337
      $region38: #{tpu_custom_call.1} parent=5 // pred_check_branch
        %340 = sbr.rel (%p338) target = $region40
      $region39: #{tpu_custom_call.1} parent=5 // pred_region
        // Predicated region
        $region41: #{tpu_custom_call.1} parent=39 // pred_check
          %p341 = pneg %p48
        $region42: #{tpu_custom_call.1} parent=39 // pred_check_branch
          %343 = sbr.rel (%p341) target = $region44
        $region43: #{tpu_custom_call.1} parent=39 // pred_region
          %s344 = sand.u32 %s38, 1
          %s345 = scalar_lea.sflag [#allocation3], %s344
          %s346 = sand.u32 %s38, 1
          %s347 = smul.addr %s346, 8
          %s348 = scalar_lea.vmem [#allocation2], %s347
          %s350 = ssub.s32 128, 128
          %351 = vsyncadd %s345, %s350
          %s352 = smul.addr %s28, 128
          %s353 = scalar_lea.hbm %s0, %s352
          %s355 = sshll.u32 %s348, 4
          %s356 = int_to_ptr.vmem [resolvable:$true] %s355
          %358 = dma.hbm_to_vmem [thread:$0]  %s353, 128, %s356, %s345
        $region44: #{tpu_custom_call.1} parent=39 // pred_fallthru
          _
        // Predicated region
        $region45: #{tpu_custom_call.1} parent=39 // pred_check
          %p359 = pneg %p158
        $region46: #{tpu_custom_call.1} parent=39 // pred_check_branch
          %361 = sbr.rel (%p359) target = $region48
        $region47: #{tpu_custom_call.1} parent=39 // pred_region
          %p362 = scmp.lt.s32.totalorder %s28, 1
          %s363 = scalar_select %p362, %s28, 1
          %s364 = smul.addr %s363, 8
          %s365 = scalar_lea.vmem %s5, %s364
        $region48: #{tpu_custom_call.1} parent=39 // pred_fallthru
          _
      $region40: #{tpu_custom_call.1} parent=5 // pred_fallthru
        _
      %p366 = scmp.le.s32.totalorder 1, %s28
      %p367 = scmp.lt.s32.totalorder %s28, 3
      %p368 = pnand %p366, %p367
      %p369 = pneg %p368
      // Predicated region
      $region49: #{tpu_custom_call.1} parent=5 // pred_check
        _
      $region50: #{tpu_custom_call.1} parent=5 // pred_check_branch
        %371 = sbr.rel (%p368) target = $region52
      $region51: #{tpu_custom_call.1} parent=5 // pred_region
        %s372 = ssub.s32 %s28, 1
        %s373 = sand.u32 %s41, 1
        %s374 = scalar_lea.sflag [#allocation3], %s373
        %s375 = sand.u32 %s41, 1
        %s376 = smul.addr %s375, 8
        %s377 = scalar_lea.vmem [#allocation2], %s376
        // Predicated region
        $region53: #{tpu_custom_call.1} parent=51 // pred_check
          %p378 = pneg %p54
        $region54: #{tpu_custom_call.1} parent=51 // pred_check_branch
          %380 = sbr.rel (%p378) target = $region56
        $region55: #{tpu_custom_call.1} parent=51 // pred_region
          %381 = dma.done %s374, 128
        $region56: #{tpu_custom_call.1} parent=51 // pred_fallthru
          _
        // Predicated region
        $region57: #{tpu_custom_call.1} parent=51 // pred_check
          %p382 = pneg %p75
        $region58: #{tpu_custom_call.1} parent=51 // pred_check_branch
          %384 = sbr.rel (%p382) target = $region60
        $region59: #{tpu_custom_call.1} parent=51 // pred_region
          %385 = dma.done [#allocation6], 128
        $region60: #{tpu_custom_call.1} parent=51 // pred_fallthru
          _
        // Predicated region
        $region61: #{tpu_custom_call.1} parent=51 // pred_check
          %p386 = pneg %p96
        $region62: #{tpu_custom_call.1} parent=51 // pred_check_branch
          %388 = sbr.rel (%p386) target = $region64
        $region63: #{tpu_custom_call.1} parent=51 // pred_region
          %389 = dma.done [#allocation6], 512
        $region64: #{tpu_custom_call.1} parent=51 // pred_fallthru
          _
        // Predicated region
        $region65: #{tpu_custom_call.1} parent=51 // pred_check
          %p390 = pneg %p117
        $region66: #{tpu_custom_call.1} parent=51 // pred_check_branch
          %392 = sbr.rel (%p390) target = $region68
        $region67: #{tpu_custom_call.1} parent=51 // pred_region
          %393 = dma.done [#allocation9], 512
        $region68: #{tpu_custom_call.1} parent=51 // pred_fallthru
          _
        // Predicated region
        $region69: #{tpu_custom_call.1} parent=51 // pred_check
          %p394 = pneg %p185
        $region70: #{tpu_custom_call.1} parent=51 // pred_check_branch
          %396 = sbr.rel (%p394) target = $region72
        $region71: #{tpu_custom_call.1} parent=51 // pred_region
          %397 = dma.done [#allocation9], 128
        $region72: #{tpu_custom_call.1} parent=51 // pred_fallthru
          _
        // Predicated region
        $region73: #{tpu_custom_call.1} parent=51 // pred_check
          %p398 = pneg %p206
        $region74: #{tpu_custom_call.1} parent=51 // pred_check_branch
          %400 = sbr.rel (%p398) target = $region76
        $region75: #{tpu_custom_call.1} parent=51 // pred_region
          %401 = dma.done [#allocation12], 512
        $region76: #{tpu_custom_call.1} parent=51 // pred_fallthru
          _
        %s402 = sand.u32 %s41, 1
        %s403 = scalar_lea.sflag [#allocation3], %s402
        %s404 = sand.u32 %s41, 1
        %s405 = smul.addr %s404, 8
        %s406 = scalar_lea.vmem [#allocation2], %s405
        %p407 = pneg %p54
        %p408 = pneg %p51
        %p409 = pneg %p75
        %p410 = pneg %p72
        %p411 = pneg %p96
        %p412 = pneg %p93
        %p413 = pneg %p117
        %p414 = pneg %p114
        %p415 = pneg %p138
        %p416 = pneg %p135
        %p417 = scmp.lt.s32.totalorder %s33, 1
        %s418 = scalar_select %p417, %s33, 1
        %s419 = smul.addr %s418, 8
        %s420 = scalar_lea.vmem %s5, %s419
        %p421 = pneg %p164
        %p422 = pneg %p161
        %p423 = pneg %p185
        %p424 = pneg %p182
        %p425 = pneg %p206
        %p426 = pneg %p203
        %p427 = pneg %p232
        %p428 = pneg %p229
        %s429 = sand.u32 %s219, 1
        %s430 = scalar_lea.sflag [#allocation4], %s429
        %s431 = sand.u32 %s219, 1
        %s432 = smul.addr %s431, 8
        %s433 = scalar_lea.vmem [#allocation13], %s432
        %p434 = pneg %p258
        %p435 = pneg %p255
        %s436 = sand.u32 %s245, 1
        %s437 = scalar_lea.sflag [#allocation15], %s436
        %s438 = sand.u32 %s245, 1
        %s439 = smul.addr %s438, 32
        %s440 = scalar_lea.vmem [#allocation14], %s439
        %p441 = scmp.lt.s32.totalorder %s33, 1
        %s442 = scalar_select %p441, %s33, 1
        %s443 = smul.addr %s442, 8
        %s444 = scalar_lea.vmem %s5, %s443
        %v445 = vld [vmem:[#allocation5] sm:$0xff]
        %v446 = vld [vmem:[#allocation7] sm:$0xff]
        %v447 = vld [vmem:[#allocation7 + $0x8] sm:$0xff]
        %v448 = vld [vmem:[#allocation7 + $0x10] sm:$0xff]
        %v449 = vld [vmem:[#allocation7 + $0x18] sm:$0xff]
        %vm450 = vcmask 261120
        %v452 = vsel %vm450, %v445, 0
        %454 = vmatprep.subr.mxu0 0.0
        %455 = vmatpush1.msra.mxu0 %v446
        %456 = vmatprep.subr.mxu0 0.0
        %457 = vmatpush1.msra.mxu0 %v447
        %458 = vmatprep.subr.mxu0 0.0
        %459 = vmatpush1.msra.mxu0 %v448
        %460 = vmatprep.subr.mxu0 0.0
        %461 = vmatpush1.msra.mxu0 %v449
        %462 = vmatprep.subr.mxu0 0.0
        %463 = vmatpush1.msra.mxu0 0.0
        %464 = vmatprep.subr.mxu0 0.0
        %465 = vmatpush1.msra.mxu0 0.0
        %466 = vmatprep.subr.mxu0 0.0
        %467 = vmatpush1.msra.mxu0 0.0
        %468 = vmatprep.subr.mxu0 0.0
        %469 = vmatpush1.msra.mxu0 0.0
        %470 = vmatprep.subr.mxu0 0.0
        %471 = vmatpush1.msra.mxu0 0.0
        %472 = vmatprep.subr.mxu0 0.0
        %473 = vmatpush1.msra.mxu0 0.0
        %474 = vmatprep.subr.mxu0 0.0
        %475 = vmatpush1.msra.mxu0 0.0
        %476 = vmatprep.subr.mxu0 0.0
        %477 = vmatpush1.msra.mxu0 0.0
        %478 = vmatprep.subr.mxu0 0.0
        %479 = vmatpush1.msra.mxu0 0.0
        %480 = vmatprep.subr.mxu0 0.0
        %481 = vmatpush1.msra.mxu0 0.0
        %482 = vmatprep.subr.mxu0 0.0
        %483 = vmatpush1.msra.mxu0 0.0
        %484 = vmatprep.subr.mxu0 0.0
        %485 = vmatpush1.msra.mxu0 0.0
        %486 = vmatprep.subr.mxu0 0.0
        %487 = vmatpush1.msra.mxu0 0.0
        %488 = vmatprep.subr.mxu0 0.0
        %489 = vmatpush1.msra.mxu0 0.0
        %490 = vmatprep.subr.mxu0 0.0
        %491 = vmatpush1.msra.mxu0 0.0
        %492 = vmatprep.subr.mxu0 0.0
        %493 = vmatpush1.msra.mxu0 0.0
        %494 = vmatprep.subr.mxu0 0.0
        %495 = vmatpush1.msra.mxu0 0.0
        %496 = vmatprep.subr.mxu0 0.0
        %497 = vmatpush1.msra.mxu0 0.0
        %498 = vmatprep.subr.mxu0 0.0
        %499 = vmatpush1.msra.mxu0 0.0
        %500 = vmatprep.subr.mxu0 0.0
        %501 = vmatpush1.msra.mxu0 0.0
        %502 = vmatprep.subr.mxu0 0.0
        %503 = vmatpush1.msra.mxu0 0.0
        %504 = vmatprep.subr.mxu0 0.0
        %505 = vmatpush1.msra.mxu0 0.0
        %506 = vmatprep.subr.mxu0 0.0
        %507 = vmatpush1.msra.mxu0 0.0
        %508 = vmatprep.subr.mxu0 0.0
        %509 = vmatpush1.msra.mxu0 0.0
        %510 = vmatprep.subr.mxu0 0.0
        %511 = vmatpush1.msra.mxu0 0.0
        %512 = vmatprep.subr.mxu0 0.0
        %513 = vmatpush1.msra.mxu0 0.0
        %514 = vmatprep.subr.mxu0 0.0
        %515 = vmatpush1.msra.mxu0 0.0
        %516 = vmatprep.subr.mxu0 0.0
        %517 = vmatpush1.msra.mxu0 0.0
        %518 = vmatprep.mubr.f32.mxu0 0.0
        %519 = vmatmul.mubr.f32.gmra.mrb[0].mxu0 %v452
        %v520 = vpop.f32.mrb[0].mxu0
        %v521 = vadd.f32 0.0, %v520
        %v522 = vpop.f32.mrb[0].mxu0
        %523 = vdwg.mxu0
        %v524 = vld [vmem:[%s377] sm:$0xff]
        %v525 = vadd.f32 %v524, %v521
        %v526 = vld [vmem:[#allocation8] sm:$0xff]
        %v527 = vld [vmem:[#allocation8 + $0x8] sm:$0xff]
        %v528 = vld [vmem:[#allocation8 + $0x10] sm:$0xff]
        %v529 = vld [vmem:[#allocation8 + $0x18] sm:$0xff]
        %v530 = vld [vmem:[%s4] sm:$0x1]
        %v532 = vlaneseq
        %v533 = vshrl.u32 %v532, 7
        %v534 = vsub.s32 0, %v533
        %v535 = vrot.slane %v530, %v534
        %v538 = vsel %vm450, %v525, 0
        %540 = vmatprep.subr.mxu0 0.0
        %541 = vmatpush1.msra.mxu0 %v526
        %542 = vmatprep.subr.mxu0 0.0
        %543 = vmatpush1.msra.mxu0 %v527
        %544 = vmatprep.subr.mxu0 0.0
        %545 = vmatpush1.msra.mxu0 %v528
        %546 = vmatprep.subr.mxu0 0.0
        %547 = vmatpush1.msra.mxu0 %v529
        %548 = vmatprep.subr.mxu0 0.0
        %549 = vmatpush1.msra.mxu0 0.0
        %550 = vmatprep.subr.mxu0 0.0
        %551 = vmatpush1.msra.mxu0 0.0
        %552 = vmatprep.subr.mxu0 0.0
        %553 = vmatpush1.msra.mxu0 0.0
        %554 = vmatprep.subr.mxu0 0.0
        %555 = vmatpush1.msra.mxu0 0.0
        %556 = vmatprep.subr.mxu0 0.0
        %557 = vmatpush1.msra.mxu0 0.0
        %558 = vmatprep.subr.mxu0 0.0
        %559 = vmatpush1.msra.mxu0 0.0
        %560 = vmatprep.subr.mxu0 0.0
        %561 = vmatpush1.msra.mxu0 0.0
        %562 = vmatprep.subr.mxu0 0.0
        %563 = vmatpush1.msra.mxu0 0.0
        %564 = vmatprep.subr.mxu0 0.0
        %565 = vmatpush1.msra.mxu0 0.0
        %566 = vmatprep.subr.mxu0 0.0
        %567 = vmatpush1.msra.mxu0 0.0
        %568 = vmatprep.subr.mxu0 0.0
        %569 = vmatpush1.msra.mxu0 0.0
        %570 = vmatprep.subr.mxu0 0.0
        %571 = vmatpush1.msra.mxu0 0.0
        %572 = vmatprep.subr.mxu0 0.0
        %573 = vmatpush1.msra.mxu0 0.0
        %574 = vmatprep.subr.mxu0 0.0
        %575 = vmatpush1.msra.mxu0 0.0
        %576 = vmatprep.subr.mxu0 0.0
        %577 = vmatpush1.msra.mxu0 0.0
        %578 = vmatprep.subr.mxu0 0.0
        %579 = vmatpush1.msra.mxu0 0.0
        %580 = vmatprep.subr.mxu0 0.0
        %581 = vmatpush1.msra.mxu0 0.0
        %582 = vmatprep.subr.mxu0 0.0
        %583 = vmatpush1.msra.mxu0 0.0
        %584 = vmatprep.subr.mxu0 0.0
        %585 = vmatpush1.msra.mxu0 0.0
        %586 = vmatprep.subr.mxu0 0.0
        %587 = vmatpush1.msra.mxu0 0.0
        %588 = vmatprep.subr.mxu0 0.0
        %589 = vmatpush1.msra.mxu0 0.0
        %590 = vmatprep.subr.mxu0 0.0
        %591 = vmatpush1.msra.mxu0 0.0
        %592 = vmatprep.subr.mxu0 0.0
        %593 = vmatpush1.msra.mxu0 0.0
        %594 = vmatprep.subr.mxu0 0.0
        %595 = vmatpush1.msra.mxu0 0.0
        %596 = vmatprep.subr.mxu0 0.0
        %597 = vmatpush1.msra.mxu0 0.0
        %598 = vmatprep.subr.mxu0 0.0
        %599 = vmatpush1.msra.mxu0 0.0
        %600 = vmatprep.subr.mxu0 0.0
        %601 = vmatpush1.msra.mxu0 0.0
        %602 = vmatprep.subr.mxu0 0.0
        %603 = vmatpush1.msra.mxu0 0.0
        %604 = vmatprep.mubr.f32.mxu0 0.0
        %605 = vmatmul.mubr.f32.gmra.mrb[0].mxu0 %v538
        %v606 = vpop.f32.mrb[0].mxu0
        %v607 = vadd.f32 %v535, %v606
        %v608 = vpop.f32.mrb[0].mxu0
        %609 = vdwg.mxu0
        %v610 = vld [vmem:[#allocation10] sm:$0xff]
        %v611 = vld [vmem:[%s444] sm:$0xff]
        %vm612 = vcmp.eq.f32.partialorder %v611, 0.0
        %614 = vrot.lane.b32.xlu0 %v607, 96
        %v615 = vpop.permute.xlu0 %614
        %vm616 = vcmask 64512
        %v617 = vsel %vm616, %v607, 0
        %v619 = vsel %vm616, %v615, 0
        %621 = vmatprep.subr.mxu0 0.0
        %622 = vmatpush1.xpose.msra.mxu0 %v619
        %623 = vmatprep.subr.mxu0 0.0
        %624 = vmatpush1.xpose.msra.mxu0 0.0
        %625 = vmatprep.subr.mxu0 0.0
        %626 = vmatpush1.xpose.msra.mxu0 0.0
        %627 = vmatprep.subr.mxu0 0.0
        %628 = vmatpush1.xpose.msra.mxu0 0.0
        %629 = vmatprep.subr.mxu0 0.0
        %630 = vmatpush1.xpose.msra.mxu0 0.0
        %631 = vmatprep.subr.mxu0 0.0
        %632 = vmatpush1.xpose.msra.mxu0 0.0
        %633 = vmatprep.subr.mxu0 0.0
        %634 = vmatpush1.xpose.msra.mxu0 0.0
        %635 = vmatprep.subr.mxu0 0.0
        %636 = vmatpush1.xpose.msra.mxu0 0.0
        %637 = vmatprep.subr.mxu0 0.0
        %638 = vmatpush1.xpose.msra.mxu0 0.0
        %639 = vmatprep.subr.mxu0 0.0
        %640 = vmatpush1.xpose.msra.mxu0 0.0
        %641 = vmatprep.subr.mxu0 0.0
        %642 = vmatpush1.xpose.msra.mxu0 0.0
        %643 = vmatprep.subr.mxu0 0.0
        %644 = vmatpush1.xpose.msra.mxu0 0.0
        %645 = vmatprep.subr.mxu0 0.0
        %646 = vmatpush1.xpose.msra.mxu0 0.0
        %647 = vmatprep.subr.mxu0 0.0
        %648 = vmatpush1.xpose.msra.mxu0 0.0
        %649 = vmatprep.subr.mxu0 0.0
        %650 = vmatpush1.xpose.msra.mxu0 0.0
        %651 = vmatprep.subr.mxu0 0.0
        %652 = vmatpush1.xpose.msra.mxu0 0.0
        %653 = vmatprep.subr.mxu0 0.0
        %654 = vmatpush1.xpose.msra.mxu0 0.0
        %655 = vmatprep.subr.mxu0 0.0
        %656 = vmatpush1.xpose.msra.mxu0 0.0
        %657 = vmatprep.subr.mxu0 0.0
        %658 = vmatpush1.xpose.msra.mxu0 0.0
        %659 = vmatprep.subr.mxu0 0.0
        %660 = vmatpush1.xpose.msra.mxu0 0.0
        %661 = vmatprep.subr.mxu0 0.0
        %662 = vmatpush1.xpose.msra.mxu0 0.0
        %663 = vmatprep.subr.mxu0 0.0
        %664 = vmatpush1.xpose.msra.mxu0 0.0
        %665 = vmatprep.subr.mxu0 0.0
        %666 = vmatpush1.xpose.msra.mxu0 0.0
        %667 = vmatprep.subr.mxu0 0.0
        %668 = vmatpush1.xpose.msra.mxu0 0.0
        %669 = vmatprep.subr.mxu0 0.0
        %670 = vmatpush1.xpose.msra.mxu0 0.0
        %671 = vmatprep.subr.mxu0 0.0
        %672 = vmatpush1.xpose.msra.mxu0 0.0
        %673 = vmatprep.subr.mxu0 0.0
        %674 = vmatpush1.xpose.msra.mxu0 0.0
        %675 = vmatprep.subr.mxu0 0.0
        %676 = vmatpush1.xpose.msra.mxu0 0.0
        %677 = vmatprep.subr.mxu0 0.0
        %678 = vmatpush1.xpose.msra.mxu0 0.0
        %679 = vmatprep.subr.mxu0 0.0
        %680 = vmatpush1.xpose.msra.mxu0 0.0
        %681 = vmatprep.subr.mxu0 0.0
        %682 = vmatpush1.xpose.msra.mxu0 0.0
        %683 = vmatprep.subr.mxu0 0.0
        %684 = vmatpush1.xpose.msra.mxu0 0.0
        %685 = vmatprep.mubr.f32.mxu0 0.0
        %686 = vmatmul.mubr.f32.gmra.mrb[0].mxu0 %v617
        %v687 = vpop.f32.mrb[0].mxu0
        %v688 = vadd.f32 0.0, %v687
        %v689 = vpop.f32.mrb[0].mxu0
        %690 = vdwg.mxu0
        %v691 = vrcp.pop 2.828427
        %v692 = vmul.f32 %v688, %v691
        %v693 = vadd.f32 %v692, %v610
        %v694 = vsel %vm612, -1e+10, %v693
        %v695 = vsel %vm616, %v694, -inf
        %696 = vmax.xlane.f32.xlu0 %v695
        %v697 = vpop.xlane.xlu0 %696
        %v698 = vsub.f32 %v694, %v697
        %v699 = vmul.f32 %v698, 1.442695
        %v700 = vpow.pop %v699
        %v701 = vsel %vm616, %v700, 0.0
        %702 = vadd.xlane.f32.xlu0 %v701
        %v703 = vpop.xlane.xlu0 %702
        %v704 = vrcp.pop %v703
        %v705 = vmul.f32 %v700, %v704
        %706 = vst.msk [vmem:[%s440] sm:$0xff] %vm616, %v705
        %707 = vrot.lane.b32.xlu0 %v607, 64
        %v708 = vpop.permute.xlu0 %707
        %v711 = vsel %vm616, %v705, 0
        %713 = vmatprep.subr.mxu0 0.0
        %714 = vmatpush1.msra.mxu0 %v708
        %715 = vmatprep.subr.mxu0 0.0
        %716 = vmatpush1.msra.mxu0 0.0
        %717 = vmatprep.subr.mxu0 0.0
        %718 = vmatpush1.msra.mxu0 0.0
        %719 = vmatprep.subr.mxu0 0.0
        %720 = vmatpush1.msra.mxu0 0.0
        %721 = vmatprep.subr.mxu0 0.0
        %722 = vmatpush1.msra.mxu0 0.0
        %723 = vmatprep.subr.mxu0 0.0
        %724 = vmatpush1.msra.mxu0 0.0
        %725 = vmatprep.subr.mxu0 0.0
        %726 = vmatpush1.msra.mxu0 0.0
        %727 = vmatprep.subr.mxu0 0.0
        %728 = vmatpush1.msra.mxu0 0.0
        %729 = vmatprep.subr.mxu0 0.0
        %730 = vmatpush1.msra.mxu0 0.0
        %731 = vmatprep.subr.mxu0 0.0
        %732 = vmatpush1.msra.mxu0 0.0
        %733 = vmatprep.subr.mxu0 0.0
        %734 = vmatpush1.msra.mxu0 0.0
        %735 = vmatprep.subr.mxu0 0.0
        %736 = vmatpush1.msra.mxu0 0.0
        %737 = vmatprep.subr.mxu0 0.0
        %738 = vmatpush1.msra.mxu0 0.0
        %739 = vmatprep.subr.mxu0 0.0
        %740 = vmatpush1.msra.mxu0 0.0
        %741 = vmatprep.subr.mxu0 0.0
        %742 = vmatpush1.msra.mxu0 0.0
        %743 = vmatprep.subr.mxu0 0.0
        %744 = vmatpush1.msra.mxu0 0.0
        %745 = vmatprep.subr.mxu0 0.0
        %746 = vmatpush1.msra.mxu0 0.0
        %747 = vmatprep.subr.mxu0 0.0
        %748 = vmatpush1.msra.mxu0 0.0
        %749 = vmatprep.subr.mxu0 0.0
        %750 = vmatpush1.msra.mxu0 0.0
        %751 = vmatprep.subr.mxu0 0.0
        %752 = vmatpush1.msra.mxu0 0.0
        %753 = vmatprep.subr.mxu0 0.0
        %754 = vmatpush1.msra.mxu0 0.0
        %755 = vmatprep.subr.mxu0 0.0
        %756 = vmatpush1.msra.mxu0 0.0
        %757 = vmatprep.subr.mxu0 0.0
        %758 = vmatpush1.msra.mxu0 0.0
        %759 = vmatprep.subr.mxu0 0.0
        %760 = vmatpush1.msra.mxu0 0.0
        %761 = vmatprep.subr.mxu0 0.0
        %762 = vmatpush1.msra.mxu0 0.0
        %763 = vmatprep.subr.mxu0 0.0
        %764 = vmatpush1.msra.mxu0 0.0
        %765 = vmatprep.subr.mxu0 0.0
        %766 = vmatpush1.msra.mxu0 0.0
        %767 = vmatprep.subr.mxu0 0.0
        %768 = vmatpush1.msra.mxu0 0.0
        %769 = vmatprep.subr.mxu0 0.0
        %770 = vmatpush1.msra.mxu0 0.0
        %771 = vmatprep.subr.mxu0 0.0
        %772 = vmatpush1.msra.mxu0 0.0
        %773 = vmatprep.subr.mxu0 0.0
        %774 = vmatpush1.msra.mxu0 0.0
        %775 = vmatprep.subr.mxu0 0.0
        %776 = vmatpush1.msra.mxu0 0.0
        %777 = vmatprep.mubr.f32.mxu0 0.0
        %778 = vmatmul.mubr.f32.gmra.mrb[0].mxu0 %v711
        %v779 = vpop.f32.mrb[0].mxu0
        %v780 = vadd.f32 0.0, %v779
        %v781 = vpop.f32.mrb[0].mxu0
        %782 = vdwg.mxu0
        %v783 = vld [vmem:[#allocation11] sm:$0xff]
        %784 = vrot.lane.b32.xlu0 %v607, 120
        %v785 = vpop.permute.xlu0 %784
        %786 = vrot.lane.b32.xlu0 %v607, 88
        %v787 = vpop.permute.xlu0 %786
        %v788 = vsel %vm616, %v785, 0
        %v790 = vsel %vm616, %v787, 0
        %792 = vmatprep.subr.mxu0 0.0
        %793 = vmatpush1.xpose.msra.mxu0 %v790
        %794 = vmatprep.subr.mxu0 0.0
        %795 = vmatpush1.xpose.msra.mxu0 0.0
        %796 = vmatprep.subr.mxu0 0.0
        %797 = vmatpush1.xpose.msra.mxu0 0.0
        %798 = vmatprep.subr.mxu0 0.0
        %799 = vmatpush1.xpose.msra.mxu0 0.0
        %800 = vmatprep.subr.mxu0 0.0
        %801 = vmatpush1.xpose.msra.mxu0 0.0
        %802 = vmatprep.subr.mxu0 0.0
        %803 = vmatpush1.xpose.msra.mxu0 0.0
        %804 = vmatprep.subr.mxu0 0.0
        %805 = vmatpush1.xpose.msra.mxu0 0.0
        %806 = vmatprep.subr.mxu0 0.0
        %807 = vmatpush1.xpose.msra.mxu0 0.0
        %808 = vmatprep.subr.mxu0 0.0
        %809 = vmatpush1.xpose.msra.mxu0 0.0
        %810 = vmatprep.subr.mxu0 0.0
        %811 = vmatpush1.xpose.msra.mxu0 0.0
        %812 = vmatprep.subr.mxu0 0.0
        %813 = vmatpush1.xpose.msra.mxu0 0.0
        %814 = vmatprep.subr.mxu0 0.0
        %815 = vmatpush1.xpose.msra.mxu0 0.0
        %816 = vmatprep.subr.mxu0 0.0
        %817 = vmatpush1.xpose.msra.mxu0 0.0
        %818 = vmatprep.subr.mxu0 0.0
        %819 = vmatpush1.xpose.msra.mxu0 0.0
        %820 = vmatprep.subr.mxu0 0.0
        %821 = vmatpush1.xpose.msra.mxu0 0.0
        %822 = vmatprep.subr.mxu0 0.0
        %823 = vmatpush1.xpose.msra.mxu0 0.0
        %824 = vmatprep.subr.mxu0 0.0
        %825 = vmatpush1.xpose.msra.mxu0 0.0
        %826 = vmatprep.subr.mxu0 0.0
        %827 = vmatpush1.xpose.msra.mxu0 0.0
        %828 = vmatprep.subr.mxu0 0.0
        %829 = vmatpush1.xpose.msra.mxu0 0.0
        %830 = vmatprep.subr.mxu0 0.0
        %831 = vmatpush1.xpose.msra.mxu0 0.0
        %832 = vmatprep.subr.mxu0 0.0
        %833 = vmatpush1.xpose.msra.mxu0 0.0
        %834 = vmatprep.subr.mxu0 0.0
        %835 = vmatpush1.xpose.msra.mxu0 0.0
        %836 = vmatprep.subr.mxu0 0.0
        %837 = vmatpush1.xpose.msra.mxu0 0.0
        %838 = vmatprep.subr.mxu0 0.0
        %839 = vmatpush1.xpose.msra.mxu0 0.0
        %840 = vmatprep.subr.mxu0 0.0
        %841 = vmatpush1.xpose.msra.mxu0 0.0
        %842 = vmatprep.subr.mxu0 0.0
        %843 = vmatpush1.xpose.msra.mxu0 0.0
        %844 = vmatprep.subr.mxu0 0.0
        %845 = vmatpush1.xpose.msra.mxu0 0.0
        %846 = vmatprep.subr.mxu0 0.0
        %847 = vmatpush1.xpose.msra.mxu0 0.0
        %848 = vmatprep.subr.mxu0 0.0
        %849 = vmatpush1.xpose.msra.mxu0 0.0
        %850 = vmatprep.subr.mxu0 0.0
        %851 = vmatpush1.xpose.msra.mxu0 0.0
        %852 = vmatprep.subr.mxu0 0.0
        %853 = vmatpush1.xpose.msra.mxu0 0.0
        %854 = vmatprep.subr.mxu0 0.0
        %855 = vmatpush1.xpose.msra.mxu0 0.0
        %856 = vmatprep.mubr.f32.mxu0 0.0
        %857 = vmatmul.mubr.f32.gmra.mrb[0].mxu0 %v788
        %v858 = vpop.f32.mrb[0].mxu0
        %v859 = vadd.f32 0.0, %v858
        %v860 = vpop.f32.mrb[0].mxu0
        %861 = vdwg.mxu0
        %v862 = vmul.f32 %v859, %v691
        %v863 = vadd.f32 %v862, %v610
        %v864 = vsel %vm612, -1e+10, %v863
        %v865 = vsel %vm616, %v864, -inf
        %866 = vmax.xlane.f32.xlu0 %v865
        %v867 = vpop.xlane.xlu0 %866
        %v868 = vsub.f32 %v864, %v867
        %v869 = vmul.f32 %v868, 1.442695
        %v870 = vpow.pop %v869
        %v871 = vsel %vm616, %v870, 0.0
        %872 = vadd.xlane.f32.xlu0 %v871
        %v873 = vpop.xlane.xlu0 %872
        %v874 = vrcp.pop %v873
        %v875 = vmul.f32 %v870, %v874
        %s876 = scalar_lea.vmem %s440, 8 [#allocation14]
        %877 = vst.msk [vmem:[%s876] sm:$0xff] %vm616, %v875
        %878 = vrot.lane.b32.xlu0 %v607, 56
        %v879 = vpop.permute.xlu0 %878
        %v882 = vsel %vm616, %v875, 0
        %884 = vmatprep.subr.mxu0 0.0
        %885 = vmatpush1.msra.mxu0 %v879
        %886 = vmatprep.subr.mxu0 0.0
        %887 = vmatpush1.msra.mxu0 0.0
        %888 = vmatprep.subr.mxu0 0.0
        %889 = vmatpush1.msra.mxu0 0.0
        %890 = vmatprep.subr.mxu0 0.0
        %891 = vmatpush1.msra.mxu0 0.0
        %892 = vmatprep.subr.mxu0 0.0
        %893 = vmatpush1.msra.mxu0 0.0
        %894 = vmatprep.subr.mxu0 0.0
        %895 = vmatpush1.msra.mxu0 0.0
        %896 = vmatprep.subr.mxu0 0.0
        %897 = vmatpush1.msra.mxu0 0.0
        %898 = vmatprep.subr.mxu0 0.0
        %899 = vmatpush1.msra.mxu0 0.0
        %900 = vmatprep.subr.mxu0 0.0
        %901 = vmatpush1.msra.mxu0 0.0
        %902 = vmatprep.subr.mxu0 0.0
        %903 = vmatpush1.msra.mxu0 0.0
        %904 = vmatprep.subr.mxu0 0.0
        %905 = vmatpush1.msra.mxu0 0.0
        %906 = vmatprep.subr.mxu0 0.0
        %907 = vmatpush1.msra.mxu0 0.0
        %908 = vmatprep.subr.mxu0 0.0
        %909 = vmatpush1.msra.mxu0 0.0
        %910 = vmatprep.subr.mxu0 0.0
        %911 = vmatpush1.msra.mxu0 0.0
        %912 = vmatprep.subr.mxu0 0.0
        %913 = vmatpush1.msra.mxu0 0.0
        %914 = vmatprep.subr.mxu0 0.0
        %915 = vmatpush1.msra.mxu0 0.0
        %916 = vmatprep.subr.mxu0 0.0
        %917 = vmatpush1.msra.mxu0 0.0
        %918 = vmatprep.subr.mxu0 0.0
        %919 = vmatpush1.msra.mxu0 0.0
        %920 = vmatprep.subr.mxu0 0.0
        %921 = vmatpush1.msra.mxu0 0.0
        %922 = vmatprep.subr.mxu0 0.0
        %923 = vmatpush1.msra.mxu0 0.0
        %924 = vmatprep.subr.mxu0 0.0
        %925 = vmatpush1.msra.mxu0 0.0
        %926 = vmatprep.subr.mxu0 0.0
        %927 = vmatpush1.msra.mxu0 0.0
        %928 = vmatprep.subr.mxu0 0.0
        %929 = vmatpush1.msra.mxu0 0.0
        %930 = vmatprep.subr.mxu0 0.0
        %931 = vmatpush1.msra.mxu0 0.0
        %932 = vmatprep.subr.mxu0 0.0
        %933 = vmatpush1.msra.mxu0 0.0
        %934 = vmatprep.subr.mxu0 0.0
        %935 = vmatpush1.msra.mxu0 0.0
        %936 = vmatprep.subr.mxu0 0.0
        %937 = vmatpush1.msra.mxu0 0.0
        %938 = vmatprep.subr.mxu0 0.0
        %939 = vmatpush1.msra.mxu0 0.0
        %940 = vmatprep.subr.mxu0 0.0
        %941 = vmatpush1.msra.mxu0 0.0
        %942 = vmatprep.subr.mxu0 0.0
        %943 = vmatpush1.msra.mxu0 0.0
        %944 = vmatprep.subr.mxu0 0.0
        %945 = vmatpush1.msra.mxu0 0.0
        %946 = vmatprep.subr.mxu0 0.0
        %947 = vmatpush1.msra.mxu0 0.0
        %948 = vmatprep.mubr.f32.mxu0 0.0
        %949 = vmatmul.mubr.f32.gmra.mrb[0].mxu0 %v882
        %v950 = vpop.f32.mrb[0].mxu0
        %v951 = vadd.f32 0.0, %v950
        %v952 = vpop.f32.mrb[0].mxu0
        %953 = vdwg.mxu0
        %v954 = vld [vmem:[#allocation11 + $0x8] sm:$0xff]
        %v956 = vsel %vm616, %v951, 0
        %958 = vmatprep.subr.mxu0 0.0
        %959 = vmatpush1.msra.mxu0 %v954
        %960 = vmatprep.subr.mxu0 0.0
        %961 = vmatpush1.msra.mxu0 0.0
        %962 = vmatprep.subr.mxu0 0.0
        %963 = vmatpush1.msra.mxu0 0.0
        %964 = vmatprep.subr.mxu0 0.0
        %965 = vmatpush1.msra.mxu0 0.0
        %966 = vmatprep.subr.mxu0 0.0
        %967 = vmatpush1.msra.mxu0 0.0
        %968 = vmatprep.subr.mxu0 0.0
        %969 = vmatpush1.msra.mxu0 0.0
        %970 = vmatprep.subr.mxu0 0.0
        %971 = vmatpush1.msra.mxu0 0.0
        %972 = vmatprep.subr.mxu0 0.0
        %973 = vmatpush1.msra.mxu0 0.0
        %974 = vmatprep.subr.mxu0 0.0
        %975 = vmatpush1.msra.mxu0 0.0
        %976 = vmatprep.subr.mxu0 0.0
        %977 = vmatpush1.msra.mxu0 0.0
        %978 = vmatprep.subr.mxu0 0.0
        %979 = vmatpush1.msra.mxu0 0.0
        %980 = vmatprep.subr.mxu0 0.0
        %981 = vmatpush1.msra.mxu0 0.0
        %982 = vmatprep.subr.mxu0 0.0
        %983 = vmatpush1.msra.mxu0 0.0
        %984 = vmatprep.subr.mxu0 0.0
        %985 = vmatpush1.msra.mxu0 0.0
        %986 = vmatprep.subr.mxu0 0.0
        %987 = vmatpush1.msra.mxu0 0.0
        %988 = vmatprep.subr.mxu0 0.0
        %989 = vmatpush1.msra.mxu0 0.0
        %990 = vmatprep.subr.mxu0 0.0
        %991 = vmatpush1.msra.mxu0 0.0
        %992 = vmatprep.subr.mxu0 0.0
        %993 = vmatpush1.msra.mxu0 0.0
        %994 = vmatprep.subr.mxu0 0.0
        %995 = vmatpush1.msra.mxu0 0.0
        %996 = vmatprep.subr.mxu0 0.0
        %997 = vmatpush1.msra.mxu0 0.0
        %998 = vmatprep.subr.mxu0 0.0
        %999 = vmatpush1.msra.mxu0 0.0
        %1000 = vmatprep.subr.mxu0 0.0
        %1001 = vmatpush1.msra.mxu0 0.0
        %1002 = vmatprep.subr.mxu0 0.0
        %1003 = vmatpush1.msra.mxu0 0.0
        %1004 = vmatprep.subr.mxu0 0.0
        %1005 = vmatpush1.msra.mxu0 0.0
        %1006 = vmatprep.subr.mxu0 0.0
        %1007 = vmatpush1.msra.mxu0 0.0
        %1008 = vmatprep.subr.mxu0 0.0
        %1009 = vmatpush1.msra.mxu0 0.0
        %1010 = vmatprep.subr.mxu0 0.0
        %1011 = vmatpush1.msra.mxu0 0.0
        %1012 = vmatprep.subr.mxu0 0.0
        %1013 = vmatpush1.msra.mxu0 0.0
        %1014 = vmatprep.subr.mxu0 0.0
        %1015 = vmatpush1.msra.mxu0 0.0
        %1016 = vmatprep.subr.mxu0 0.0
        %1017 = vmatpush1.msra.mxu0 0.0
        %1018 = vmatprep.subr.mxu0 0.0
        %1019 = vmatpush1.msra.mxu0 0.0
        %1020 = vmatprep.subr.mxu0 0.0
        %1021 = vmatpush1.msra.mxu0 0.0
        %1022 = vmatprep.mubr.f32.mxu0 0.0
        %1023 = vmatmul.mubr.f32.gmra.mrb[0].mxu0 %v956
        %v1024 = vpop.f32.mrb[0].mxu0
        %v1025 = vadd.f32 0.0, %v1024
        %v1026 = vpop.f32.mrb[0].mxu0
        %1027 = vdwg.mxu0
        %v1029 = vsel %vm616, %v780, 0
        %1031 = vmatprep.subr.mxu0 0.0
        %1032 = vmatpush1.msra.mxu0 %v783
        %1033 = vmatprep.subr.mxu0 0.0
        %1034 = vmatpush1.msra.mxu0 0.0
        %1035 = vmatprep.subr.mxu0 0.0
        %1036 = vmatpush1.msra.mxu0 0.0
        %1037 = vmatprep.subr.mxu0 0.0
        %1038 = vmatpush1.msra.mxu0 0.0
        %1039 = vmatprep.subr.mxu0 0.0
        %1040 = vmatpush1.msra.mxu0 0.0
        %1041 = vmatprep.subr.mxu0 0.0
        %1042 = vmatpush1.msra.mxu0 0.0
        %1043 = vmatprep.subr.mxu0 0.0
        %1044 = vmatpush1.msra.mxu0 0.0
        %1045 = vmatprep.subr.mxu0 0.0
        %1046 = vmatpush1.msra.mxu0 0.0
        %1047 = vmatprep.subr.mxu0 0.0
        %1048 = vmatpush1.msra.mxu0 0.0
        %1049 = vmatprep.subr.mxu0 0.0
        %1050 = vmatpush1.msra.mxu0 0.0
        %1051 = vmatprep.subr.mxu0 0.0
        %1052 = vmatpush1.msra.mxu0 0.0
        %1053 = vmatprep.subr.mxu0 0.0
        %1054 = vmatpush1.msra.mxu0 0.0
        %1055 = vmatprep.subr.mxu0 0.0
        %1056 = vmatpush1.msra.mxu0 0.0
        %1057 = vmatprep.subr.mxu0 0.0
        %1058 = vmatpush1.msra.mxu0 0.0
        %1059 = vmatprep.subr.mxu0 0.0
        %1060 = vmatpush1.msra.mxu0 0.0
        %1061 = vmatprep.subr.mxu0 0.0
        %1062 = vmatpush1.msra.mxu0 0.0
        %1063 = vmatprep.subr.mxu0 0.0
        %1064 = vmatpush1.msra.mxu0 0.0
        %1065 = vmatprep.subr.mxu0 0.0
        %1066 = vmatpush1.msra.mxu0 0.0
        %1067 = vmatprep.subr.mxu0 0.0
        %1068 = vmatpush1.msra.mxu0 0.0
        %1069 = vmatprep.subr.mxu0 0.0
        %1070 = vmatpush1.msra.mxu0 0.0
        %1071 = vmatprep.subr.mxu0 0.0
        %1072 = vmatpush1.msra.mxu0 0.0
        %1073 = vmatprep.subr.mxu0 0.0
        %1074 = vmatpush1.msra.mxu0 0.0
        %1075 = vmatprep.subr.mxu0 0.0
        %1076 = vmatpush1.msra.mxu0 0.0
        %1077 = vmatprep.subr.mxu0 0.0
        %1078 = vmatpush1.msra.mxu0 0.0
        %1079 = vmatprep.subr.mxu0 0.0
        %1080 = vmatpush1.msra.mxu0 0.0
        %1081 = vmatprep.subr.mxu0 0.0
        %1082 = vmatpush1.msra.mxu0 0.0
        %1083 = vmatprep.subr.mxu0 0.0
        %1084 = vmatpush1.msra.mxu0 0.0
        %1085 = vmatprep.subr.mxu0 0.0
        %1086 = vmatpush1.msra.mxu0 0.0
        %1087 = vmatprep.subr.mxu0 0.0
        %1088 = vmatpush1.msra.mxu0 0.0
        %1089 = vmatprep.subr.mxu0 0.0
        %1090 = vmatpush1.msra.mxu0 0.0
        %1091 = vmatprep.subr.mxu0 0.0
        %1092 = vmatpush1.msra.mxu0 0.0
        %1093 = vmatprep.subr.mxu0 0.0
        %1094 = vmatpush1.msra.mxu0 0.0
        %1095 = vmatprep.mubr.f32.mxu0 0.0
        %1096 = vmatmul.mubr.f32.gmra.mrb[0].mxu0 %v1029
        %v1097 = vpop.f32.mrb[0].mxu0
        %v1098 = vadd.f32 %v1025, %v1097
        %v1099 = vpop.f32.mrb[0].mxu0
        %1100 = vdwg.mxu0
        %1101 = vrot.lane.b32.xlu0 %v607, 112
        %v1102 = vpop.permute.xlu0 %1101
        %1103 = vrot.lane.b32.xlu0 %v607, 80
        %v1104 = vpop.permute.xlu0 %1103
        %v1105 = vsel %vm616, %v1102, 0
        %v1107 = vsel %vm616, %v1104, 0
        %1109 = vmatprep.subr.mxu0 0.0
        %1110 = vmatpush1.xpose.msra.mxu0 %v1107
        %1111 = vmatprep.subr.mxu0 0.0
        %1112 = vmatpush1.xpose.msra.mxu0 0.0
        %1113 = vmatprep.subr.mxu0 0.0
        %1114 = vmatpush1.xpose.msra.mxu0 0.0
        %1115 = vmatprep.subr.mxu0 0.0
        %1116 = vmatpush1.xpose.msra.mxu0 0.0
        %1117 = vmatprep.subr.mxu0 0.0
        %1118 = vmatpush1.xpose.msra.mxu0 0.0
        %1119 = vmatprep.subr.mxu0 0.0
        %1120 = vmatpush1.xpose.msra.mxu0 0.0
        %1121 = vmatprep.subr.mxu0 0.0
        %1122 = vmatpush1.xpose.msra.mxu0 0.0
        %1123 = vmatprep.subr.mxu0 0.0
        %1124 = vmatpush1.xpose.msra.mxu0 0.0
        %1125 = vmatprep.subr.mxu0 0.0
        %1126 = vmatpush1.xpose.msra.mxu0 0.0
        %1127 = vmatprep.subr.mxu0 0.0
        %1128 = vmatpush1.xpose.msra.mxu0 0.0
        %1129 = vmatprep.subr.mxu0 0.0
        %1130 = vmatpush1.xpose.msra.mxu0 0.0
        %1131 = vmatprep.subr.mxu0 0.0
        %1132 = vmatpush1.xpose.msra.mxu0 0.0
        %1133 = vmatprep.subr.mxu0 0.0
        %1134 = vmatpush1.xpose.msra.mxu0 0.0
        %1135 = vmatprep.subr.mxu0 0.0
        %1136 = vmatpush1.xpose.msra.mxu0 0.0
        %1137 = vmatprep.subr.mxu0 0.0
        %1138 = vmatpush1.xpose.msra.mxu0 0.0
        %1139 = vmatprep.subr.mxu0 0.0
        %1140 = vmatpush1.xpose.msra.mxu0 0.0
        %1141 = vmatprep.subr.mxu0 0.0
        %1142 = vmatpush1.xpose.msra.mxu0 0.0
        %1143 = vmatprep.subr.mxu0 0.0
        %1144 = vmatpush1.xpose.msra.mxu0 0.0
        %1145 = vmatprep.subr.mxu0 0.0
        %1146 = vmatpush1.xpose.msra.mxu0 0.0
        %1147 = vmatprep.subr.mxu0 0.0
        %1148 = vmatpush1.xpose.msra.mxu0 0.0
        %1149 = vmatprep.subr.mxu0 0.0
        %1150 = vmatpush1.xpose.msra.mxu0 0.0
        %1151 = vmatprep.subr.mxu0 0.0
        %1152 = vmatpush1.xpose.msra.mxu0 0.0
        %1153 = vmatprep.subr.mxu0 0.0
        %1154 = vmatpush1.xpose.msra.mxu0 0.0
        %1155 = vmatprep.subr.mxu0 0.0
        %1156 = vmatpush1.xpose.msra.mxu0 0.0
        %1157 = vmatprep.subr.mxu0 0.0
        %1158 = vmatpush1.xpose.msra.mxu0 0.0
        %1159 = vmatprep.subr.mxu0 0.0
        %1160 = vmatpush1.xpose.msra.mxu0 0.0
        %1161 = vmatprep.subr.mxu0 0.0
        %1162 = vmatpush1.xpose.msra.mxu0 0.0
        %1163 = vmatprep.subr.mxu0 0.0
        %1164 = vmatpush1.xpose.msra.mxu0 0.0
        %1165 = vmatprep.subr.mxu0 0.0
        %1166 = vmatpush1.xpose.msra.mxu0 0.0
        %1167 = vmatprep.subr.mxu0 0.0
        %1168 = vmatpush1.xpose.msra.mxu0 0.0
        %1169 = vmatprep.subr.mxu0 0.0
        %1170 = vmatpush1.xpose.msra.mxu0 0.0
        %1171 = vmatprep.subr.mxu0 0.0
        %1172 = vmatpush1.xpose.msra.mxu0 0.0
        %1173 = vmatprep.mubr.f32.mxu0 0.0
        %1174 = vmatmul.mubr.f32.gmra.mrb[0].mxu0 %v1105
        %v1175 = vpop.f32.mrb[0].mxu0
        %v1176 = vadd.f32 0.0, %v1175
        %v1177 = vpop.f32.mrb[0].mxu0
        %1178 = vdwg.mxu0
        %v1179 = vmul.f32 %v1176, %v691
        %v1180 = vadd.f32 %v1179, %v610
        %v1181 = vsel %vm612, -1e+10, %v1180
        %v1182 = vsel %vm616, %v1181, -inf
        %1183 = vmax.xlane.f32.xlu0 %v1182
        %v1184 = vpop.xlane.xlu0 %1183
        %v1185 = vsub.f32 %v1181, %v1184
        %v1186 = vmul.f32 %v1185, 1.442695
        %v1187 = vpow.pop %v1186
        %v1188 = vsel %vm616, %v1187, 0.0
        %1189 = vadd.xlane.f32.xlu0 %v1188
        %v1190 = vpop.xlane.xlu0 %1189
        %v1191 = vrcp.pop %v1190
        %v1192 = vmul.f32 %v1187, %v1191
        %s1193 = scalar_lea.vmem %s440, 16 [#allocation14]
        %1194 = vst.msk [vmem:[%s1193] sm:$0xff] %vm616, %v1192
        %1195 = vrot.lane.b32.xlu0 %v607, 48
        %v1196 = vpop.permute.xlu0 %1195
        %v1199 = vsel %vm616, %v1192, 0
        %1201 = vmatprep.subr.mxu0 0.0
        %1202 = vmatpush1.msra.mxu0 %v1196
        %1203 = vmatprep.subr.mxu0 0.0
        %1204 = vmatpush1.msra.mxu0 0.0
        %1205 = vmatprep.subr.mxu0 0.0
        %1206 = vmatpush1.msra.mxu0 0.0
        %1207 = vmatprep.subr.mxu0 0.0
        %1208 = vmatpush1.msra.mxu0 0.0
        %1209 = vmatprep.subr.mxu0 0.0
        %1210 = vmatpush1.msra.mxu0 0.0
        %1211 = vmatprep.subr.mxu0 0.0
        %1212 = vmatpush1.msra.mxu0 0.0
        %1213 = vmatprep.subr.mxu0 0.0
        %1214 = vmatpush1.msra.mxu0 0.0
        %1215 = vmatprep.subr.mxu0 0.0
        %1216 = vmatpush1.msra.mxu0 0.0
        %1217 = vmatprep.subr.mxu0 0.0
        %1218 = vmatpush1.msra.mxu0 0.0
        %1219 = vmatprep.subr.mxu0 0.0
        %1220 = vmatpush1.msra.mxu0 0.0
        %1221 = vmatprep.subr.mxu0 0.0
        %1222 = vmatpush1.msra.mxu0 0.0
        %1223 = vmatprep.subr.mxu0 0.0
        %1224 = vmatpush1.msra.mxu0 0.0
        %1225 = vmatprep.subr.mxu0 0.0
        %1226 = vmatpush1.msra.mxu0 0.0
        %1227 = vmatprep.subr.mxu0 0.0
        %1228 = vmatpush1.msra.mxu0 0.0
        %1229 = vmatprep.subr.mxu0 0.0
        %1230 = vmatpush1.msra.mxu0 0.0
        %1231 = vmatprep.subr.mxu0 0.0
        %1232 = vmatpush1.msra.mxu0 0.0
        %1233 = vmatprep.subr.mxu0 0.0
        %1234 = vmatpush1.msra.mxu0 0.0
        %1235 = vmatprep.subr.mxu0 0.0
        %1236 = vmatpush1.msra.mxu0 0.0
        %1237 = vmatprep.subr.mxu0 0.0
        %1238 = vmatpush1.msra.mxu0 0.0
        %1239 = vmatprep.subr.mxu0 0.0
        %1240 = vmatpush1.msra.mxu0 0.0
        %1241 = vmatprep.subr.mxu0 0.0
        %1242 = vmatpush1.msra.mxu0 0.0
        %1243 = vmatprep.subr.mxu0 0.0
        %1244 = vmatpush1.msra.mxu0 0.0
        %1245 = vmatprep.subr.mxu0 0.0
        %1246 = vmatpush1.msra.mxu0 0.0
        %1247 = vmatprep.subr.mxu0 0.0
        %1248 = vmatpush1.msra.mxu0 0.0
        %1249 = vmatprep.subr.mxu0 0.0
        %1250 = vmatpush1.msra.mxu0 0.0
        %1251 = vmatprep.subr.mxu0 0.0
        %1252 = vmatpush1.msra.mxu0 0.0
        %1253 = vmatprep.subr.mxu0 0.0
        %1254 = vmatpush1.msra.mxu0 0.0
        %1255 = vmatprep.subr.mxu0 0.0
        %1256 = vmatpush1.msra.mxu0 0.0
        %1257 = vmatprep.subr.mxu0 0.0
        %1258 = vmatpush1.msra.mxu0 0.0
        %1259 = vmatprep.subr.mxu0 0.0
        %1260 = vmatpush1.msra.mxu0 0.0
        %1261 = vmatprep.subr.mxu0 0.0
        %1262 = vmatpush1.msra.mxu0 0.0
        %1263 = vmatprep.subr.mxu0 0.0
        %1264 = vmatpush1.msra.mxu0 0.0
        %1265 = vmatprep.mubr.f32.mxu0 0.0
        %1266 = vmatmul.mubr.f32.gmra.mrb[0].mxu0 %v1199
        %v1267 = vpop.f32.mrb[0].mxu0
        %v1268 = vadd.f32 0.0, %v1267
        %v1269 = vpop.f32.mrb[0].mxu0
        %1270 = vdwg.mxu0
        %v1271 = vld [vmem:[#allocation11 + $0x10] sm:$0xff]
        %v1273 = vsel %vm616, %v1268, 0
        %1275 = vmatprep.subr.mxu0 0.0
        %1276 = vmatpush1.msra.mxu0 %v1271
        %1277 = vmatprep.subr.mxu0 0.0
        %1278 = vmatpush1.msra.mxu0 0.0
        %1279 = vmatprep.subr.mxu0 0.0
        %1280 = vmatpush1.msra.mxu0 0.0
        %1281 = vmatprep.subr.mxu0 0.0
        %1282 = vmatpush1.msra.mxu0 0.0
        %1283 = vmatprep.subr.mxu0 0.0
        %1284 = vmatpush1.msra.mxu0 0.0
        %1285 = vmatprep.subr.mxu0 0.0
        %1286 = vmatpush1.msra.mxu0 0.0
        %1287 = vmatprep.subr.mxu0 0.0
        %1288 = vmatpush1.msra.mxu0 0.0
        %1289 = vmatprep.subr.mxu0 0.0
        %1290 = vmatpush1.msra.mxu0 0.0
        %1291 = vmatprep.subr.mxu0 0.0
        %1292 = vmatpush1.msra.mxu0 0.0
        %1293 = vmatprep.subr.mxu0 0.0
        %1294 = vmatpush1.msra.mxu0 0.0
        %1295 = vmatprep.subr.mxu0 0.0
        %1296 = vmatpush1.msra.mxu0 0.0
        %1297 = vmatprep.subr.mxu0 0.0
        %1298 = vmatpush1.msra.mxu0 0.0
        %1299 = vmatprep.subr.mxu0 0.0
        %1300 = vmatpush1.msra.mxu0 0.0
        %1301 = vmatprep.subr.mxu0 0.0
        %1302 = vmatpush1.msra.mxu0 0.0
        %1303 = vmatprep.subr.mxu0 0.0
        %1304 = vmatpush1.msra.mxu0 0.0
        %1305 = vmatprep.subr.mxu0 0.0
        %1306 = vmatpush1.msra.mxu0 0.0
        %1307 = vmatprep.subr.mxu0 0.0
        %1308 = vmatpush1.msra.mxu0 0.0
        %1309 = vmatprep.subr.mxu0 0.0
        %1310 = vmatpush1.msra.mxu0 0.0
        %1311 = vmatprep.subr.mxu0 0.0
        %1312 = vmatpush1.msra.mxu0 0.0
        %1313 = vmatprep.subr.mxu0 0.0
        %1314 = vmatpush1.msra.mxu0 0.0
        %1315 = vmatprep.subr.mxu0 0.0
        %1316 = vmatpush1.msra.mxu0 0.0
        %1317 = vmatprep.subr.mxu0 0.0
        %1318 = vmatpush1.msra.mxu0 0.0
        %1319 = vmatprep.subr.mxu0 0.0
        %1320 = vmatpush1.msra.mxu0 0.0
        %1321 = vmatprep.subr.mxu0 0.0
        %1322 = vmatpush1.msra.mxu0 0.0
        %1323 = vmatprep.subr.mxu0 0.0
        %1324 = vmatpush1.msra.mxu0 0.0
        %1325 = vmatprep.subr.mxu0 0.0
        %1326 = vmatpush1.msra.mxu0 0.0
        %1327 = vmatprep.subr.mxu0 0.0
        %1328 = vmatpush1.msra.mxu0 0.0
        %1329 = vmatprep.subr.mxu0 0.0
        %1330 = vmatpush1.msra.mxu0 0.0
        %1331 = vmatprep.subr.mxu0 0.0
        %1332 = vmatpush1.msra.mxu0 0.0
        %1333 = vmatprep.subr.mxu0 0.0
        %1334 = vmatpush1.msra.mxu0 0.0
        %1335 = vmatprep.subr.mxu0 0.0
        %1336 = vmatpush1.msra.mxu0 0.0
        %1337 = vmatprep.subr.mxu0 0.0
        %1338 = vmatpush1.msra.mxu0 0.0
        %1339 = vmatprep.mubr.f32.mxu0 0.0
        %1340 = vmatmul.mubr.f32.gmra.mrb[0].mxu0 %v1273
        %v1341 = vpop.f32.mrb[0].mxu0
        %v1342 = vadd.f32 0.0, %v1341
        %v1343 = vpop.f32.mrb[0].mxu0
        %1344 = vdwg.mxu0
        %v1345 = vadd.f32 %v1098, %v1342
        %1346 = vrot.lane.b32.xlu0 %v607, 104
        %v1347 = vpop.permute.xlu0 %1346
        %1348 = vrot.lane.b32.xlu0 %v607, 72
        %v1349 = vpop.permute.xlu0 %1348
        %v1350 = vsel %vm616, %v1347, 0
        %v1352 = vsel %vm616, %v1349, 0
        %1354 = vmatprep.subr.mxu0 0.0
        %1355 = vmatpush1.xpose.msra.mxu0 %v1352
        %1356 = vmatprep.subr.mxu0 0.0
        %1357 = vmatpush1.xpose.msra.mxu0 0.0
        %1358 = vmatprep.subr.mxu0 0.0
        %1359 = vmatpush1.xpose.msra.mxu0 0.0
        %1360 = vmatprep.subr.mxu0 0.0
        %1361 = vmatpush1.xpose.msra.mxu0 0.0
        %1362 = vmatprep.subr.mxu0 0.0
        %1363 = vmatpush1.xpose.msra.mxu0 0.0
        %1364 = vmatprep.subr.mxu0 0.0
        %1365 = vmatpush1.xpose.msra.mxu0 0.0
        %1366 = vmatprep.subr.mxu0 0.0
        %1367 = vmatpush1.xpose.msra.mxu0 0.0
        %1368 = vmatprep.subr.mxu0 0.0
        %1369 = vmatpush1.xpose.msra.mxu0 0.0
        %1370 = vmatprep.subr.mxu0 0.0
        %1371 = vmatpush1.xpose.msra.mxu0 0.0
        %1372 = vmatprep.subr.mxu0 0.0
        %1373 = vmatpush1.xpose.msra.mxu0 0.0
        %1374 = vmatprep.subr.mxu0 0.0
        %1375 = vmatpush1.xpose.msra.mxu0 0.0
        %1376 = vmatprep.subr.mxu0 0.0
        %1377 = vmatpush1.xpose.msra.mxu0 0.0
        %1378 = vmatprep.subr.mxu0 0.0
        %1379 = vmatpush1.xpose.msra.mxu0 0.0
        %1380 = vmatprep.subr.mxu0 0.0
        %1381 = vmatpush1.xpose.msra.mxu0 0.0
        %1382 = vmatprep.subr.mxu0 0.0
        %1383 = vmatpush1.xpose.msra.mxu0 0.0
        %1384 = vmatprep.subr.mxu0 0.0
        %1385 = vmatpush1.xpose.msra.mxu0 0.0
        %1386 = vmatprep.subr.mxu0 0.0
        %1387 = vmatpush1.xpose.msra.mxu0 0.0
        %1388 = vmatprep.subr.mxu0 0.0
        %1389 = vmatpush1.xpose.msra.mxu0 0.0
        %1390 = vmatprep.subr.mxu0 0.0
        %1391 = vmatpush1.xpose.msra.mxu0 0.0
        %1392 = vmatprep.subr.mxu0 0.0
        %1393 = vmatpush1.xpose.msra.mxu0 0.0
        %1394 = vmatprep.subr.mxu0 0.0
        %1395 = vmatpush1.xpose.msra.mxu0 0.0
        %1396 = vmatprep.subr.mxu0 0.0
        %1397 = vmatpush1.xpose.msra.mxu0 0.0
        %1398 = vmatprep.subr.mxu0 0.0
        %1399 = vmatpush1.xpose.msra.mxu0 0.0
        %1400 = vmatprep.subr.mxu0 0.0
        %1401 = vmatpush1.xpose.msra.mxu0 0.0
        %1402 = vmatprep.subr.mxu0 0.0
        %1403 = vmatpush1.xpose.msra.mxu0 0.0
        %1404 = vmatprep.subr.mxu0 0.0
        %1405 = vmatpush1.xpose.msra.mxu0 0.0
        %1406 = vmatprep.subr.mxu0 0.0
        %1407 = vmatpush1.xpose.msra.mxu0 0.0
        %1408 = vmatprep.subr.mxu0 0.0
        %1409 = vmatpush1.xpose.msra.mxu0 0.0
        %1410 = vmatprep.subr.mxu0 0.0
        %1411 = vmatpush1.xpose.msra.mxu0 0.0
        %1412 = vmatprep.subr.mxu0 0.0
        %1413 = vmatpush1.xpose.msra.mxu0 0.0
        %1414 = vmatprep.subr.mxu0 0.0
        %1415 = vmatpush1.xpose.msra.mxu0 0.0
        %1416 = vmatprep.subr.mxu0 0.0
        %1417 = vmatpush1.xpose.msra.mxu0 0.0
        %1418 = vmatprep.mubr.f32.mxu0 0.0
        %1419 = vmatmul.mubr.f32.gmra.mrb[0].mxu0 %v1350
        %v1420 = vpop.f32.mrb[0].mxu0
        %v1421 = vadd.f32 0.0, %v1420
        %v1422 = vpop.f32.mrb[0].mxu0
        %1423 = vdwg.mxu0
        %v1424 = vmul.f32 %v1421, %v691
        %v1425 = vadd.f32 %v1424, %v610
        %v1426 = vsel %vm612, -1e+10, %v1425
        %v1427 = vsel %vm616, %v1426, -inf
        %1428 = vmax.xlane.f32.xlu0 %v1427
        %v1429 = vpop.xlane.xlu0 %1428
        %v1430 = vsub.f32 %v1426, %v1429
        %v1431 = vmul.f32 %v1430, 1.442695
        %v1432 = vpow.pop %v1431
        %v1433 = vsel %vm616, %v1432, 0.0
        %1434 = vadd.xlane.f32.xlu0 %v1433
        %v1435 = vpop.xlane.xlu0 %1434
        %v1436 = vrcp.pop %v1435
        %v1437 = vmul.f32 %v1432, %v1436
        %s1438 = scalar_lea.vmem %s440, 24 [#allocation14]
        %1439 = vst.msk [vmem:[%s1438] sm:$0xff] %vm616, %v1437
        %1440 = vrot.lane.b32.xlu0 %v607, 40
        %v1441 = vpop.permute.xlu0 %1440
        %v1444 = vsel %vm616, %v1437, 0
        %1446 = vmatprep.subr.mxu0 0.0
        %1447 = vmatpush1.msra.mxu0 %v1441
        %1448 = vmatprep.subr.mxu0 0.0
        %1449 = vmatpush1.msra.mxu0 0.0
        %1450 = vmatprep.subr.mxu0 0.0
        %1451 = vmatpush1.msra.mxu0 0.0
        %1452 = vmatprep.subr.mxu0 0.0
        %1453 = vmatpush1.msra.mxu0 0.0
        %1454 = vmatprep.subr.mxu0 0.0
        %1455 = vmatpush1.msra.mxu0 0.0
        %1456 = vmatprep.subr.mxu0 0.0
        %1457 = vmatpush1.msra.mxu0 0.0
        %1458 = vmatprep.subr.mxu0 0.0
        %1459 = vmatpush1.msra.mxu0 0.0
        %1460 = vmatprep.subr.mxu0 0.0
        %1461 = vmatpush1.msra.mxu0 0.0
        %1462 = vmatprep.subr.mxu0 0.0
        %1463 = vmatpush1.msra.mxu0 0.0
        %1464 = vmatprep.subr.mxu0 0.0
        %1465 = vmatpush1.msra.mxu0 0.0
        %1466 = vmatprep.subr.mxu0 0.0
        %1467 = vmatpush1.msra.mxu0 0.0
        %1468 = vmatprep.subr.mxu0 0.0
        %1469 = vmatpush1.msra.mxu0 0.0
        %1470 = vmatprep.subr.mxu0 0.0
        %1471 = vmatpush1.msra.mxu0 0.0
        %1472 = vmatprep.subr.mxu0 0.0
        %1473 = vmatpush1.msra.mxu0 0.0
        %1474 = vmatprep.subr.mxu0 0.0
        %1475 = vmatpush1.msra.mxu0 0.0
        %1476 = vmatprep.subr.mxu0 0.0
        %1477 = vmatpush1.msra.mxu0 0.0
        %1478 = vmatprep.subr.mxu0 0.0
        %1479 = vmatpush1.msra.mxu0 0.0
        %1480 = vmatprep.subr.mxu0 0.0
        %1481 = vmatpush1.msra.mxu0 0.0
        %1482 = vmatprep.subr.mxu0 0.0
        %1483 = vmatpush1.msra.mxu0 0.0
        %1484 = vmatprep.subr.mxu0 0.0
        %1485 = vmatpush1.msra.mxu0 0.0
        %1486 = vmatprep.subr.mxu0 0.0
        %1487 = vmatpush1.msra.mxu0 0.0
        %1488 = vmatprep.subr.mxu0 0.0
        %1489 = vmatpush1.msra.mxu0 0.0
        %1490 = vmatprep.subr.mxu0 0.0
        %1491 = vmatpush1.msra.mxu0 0.0
        %1492 = vmatprep.subr.mxu0 0.0
        %1493 = vmatpush1.msra.mxu0 0.0
        %1494 = vmatprep.subr.mxu0 0.0
        %1495 = vmatpush1.msra.mxu0 0.0
        %1496 = vmatprep.subr.mxu0 0.0
        %1497 = vmatpush1.msra.mxu0 0.0
        %1498 = vmatprep.subr.mxu0 0.0
        %1499 = vmatpush1.msra.mxu0 0.0
        %1500 = vmatprep.subr.mxu0 0.0
        %1501 = vmatpush1.msra.mxu0 0.0
        %1502 = vmatprep.subr.mxu0 0.0
        %1503 = vmatpush1.msra.mxu0 0.0
        %1504 = vmatprep.subr.mxu0 0.0
        %1505 = vmatpush1.msra.mxu0 0.0
        %1506 = vmatprep.subr.mxu0 0.0
        %1507 = vmatpush1.msra.mxu0 0.0
        %1508 = vmatprep.subr.mxu0 0.0
        %1509 = vmatpush1.msra.mxu0 0.0
        %1510 = vmatprep.mubr.f32.mxu0 0.0
        %1511 = vmatmul.mubr.f32.gmra.mrb[0].mxu0 %v1444
        %v1512 = vpop.f32.mrb[0].mxu0
        %v1513 = vadd.f32 0.0, %v1512
        %v1514 = vpop.f32.mrb[0].mxu0
        %1515 = vdwg.mxu0
        %v1516 = vld [vmem:[#allocation11 + $0x18] sm:$0xff]
        %v1518 = vsel %vm616, %v1513, 0
        %1520 = vmatprep.subr.mxu0 0.0
        %1521 = vmatpush1.msra.mxu0 %v1516
        %1522 = vmatprep.subr.mxu0 0.0
        %1523 = vmatpush1.msra.mxu0 0.0
        %1524 = vmatprep.subr.mxu0 0.0
        %1525 = vmatpush1.msra.mxu0 0.0
        %1526 = vmatprep.subr.mxu0 0.0
        %1527 = vmatpush1.msra.mxu0 0.0
        %1528 = vmatprep.subr.mxu0 0.0
        %1529 = vmatpush1.msra.mxu0 0.0
        %1530 = vmatprep.subr.mxu0 0.0
        %1531 = vmatpush1.msra.mxu0 0.0
        %1532 = vmatprep.subr.mxu0 0.0
        %1533 = vmatpush1.msra.mxu0 0.0
        %1534 = vmatprep.subr.mxu0 0.0
        %1535 = vmatpush1.msra.mxu0 0.0
        %1536 = vmatprep.subr.mxu0 0.0
        %1537 = vmatpush1.msra.mxu0 0.0
        %1538 = vmatprep.subr.mxu0 0.0
        %1539 = vmatpush1.msra.mxu0 0.0
        %1540 = vmatprep.subr.mxu0 0.0
        %1541 = vmatpush1.msra.mxu0 0.0
        %1542 = vmatprep.subr.mxu0 0.0
        %1543 = vmatpush1.msra.mxu0 0.0
        %1544 = vmatprep.subr.mxu0 0.0
        %1545 = vmatpush1.msra.mxu0 0.0
        %1546 = vmatprep.subr.mxu0 0.0
        %1547 = vmatpush1.msra.mxu0 0.0
        %1548 = vmatprep.subr.mxu0 0.0
        %1549 = vmatpush1.msra.mxu0 0.0
        %1550 = vmatprep.subr.mxu0 0.0
        %1551 = vmatpush1.msra.mxu0 0.0
        %1552 = vmatprep.subr.mxu0 0.0
        %1553 = vmatpush1.msra.mxu0 0.0
        %1554 = vmatprep.subr.mxu0 0.0
        %1555 = vmatpush1.msra.mxu0 0.0
        %1556 = vmatprep.subr.mxu0 0.0
        %1557 = vmatpush1.msra.mxu0 0.0
        %1558 = vmatprep.subr.mxu0 0.0
        %1559 = vmatpush1.msra.mxu0 0.0
        %1560 = vmatprep.subr.mxu0 0.0
        %1561 = vmatpush1.msra.mxu0 0.0
        %1562 = vmatprep.subr.mxu0 0.0
        %1563 = vmatpush1.msra.mxu0 0.0
        %1564 = vmatprep.subr.mxu0 0.0
        %1565 = vmatpush1.msra.mxu0 0.0
        %1566 = vmatprep.subr.mxu0 0.0
        %1567 = vmatpush1.msra.mxu0 0.0
        %1568 = vmatprep.subr.mxu0 0.0
        %1569 = vmatpush1.msra.mxu0 0.0
        %1570 = vmatprep.subr.mxu0 0.0
        %1571 = vmatpush1.msra.mxu0 0.0
        %1572 = vmatprep.subr.mxu0 0.0
        %1573 = vmatpush1.msra.mxu0 0.0
        %1574 = vmatprep.subr.mxu0 0.0
        %1575 = vmatpush1.msra.mxu0 0.0
        %1576 = vmatprep.subr.mxu0 0.0
        %1577 = vmatpush1.msra.mxu0 0.0
        %1578 = vmatprep.subr.mxu0 0.0
        %1579 = vmatpush1.msra.mxu0 0.0
        %1580 = vmatprep.subr.mxu0 0.0
        %1581 = vmatpush1.msra.mxu0 0.0
        %1582 = vmatprep.subr.mxu0 0.0
        %1583 = vmatpush1.msra.mxu0 0.0
        %1584 = vmatprep.mubr.f32.mxu0 0.0
        %1585 = vmatmul.mubr.f32.gmra.mrb[0].mxu0 %v1518
        %v1586 = vpop.f32.mrb[0].mxu0
        %v1587 = vadd.f32 0.0, %v1586
        %v1588 = vpop.f32.mrb[0].mxu0
        %1589 = vdwg.mxu0
        %v1590 = vadd.f32 %v1345, %v1587
        %1591 = vst.msk [vmem:[%s433] sm:$0xff] %vm450, %v1590
        %s1592 = sand.u32 %s219, 1
        %s1593 = scalar_lea.sflag [#allocation4], %s1592
        %s1594 = sand.u32 %s219, 1
        %s1595 = smul.addr %s1594, 8
        %s1596 = scalar_lea.vmem [#allocation13], %s1595
        %s1597 = sand.u32 %s245, 1
        %s1598 = scalar_lea.sflag [#allocation15], %s1597
        %s1599 = sand.u32 %s245, 1
        %s1600 = smul.addr %s1599, 32
        %s1601 = scalar_lea.vmem [#allocation14], %s1600
        // Predicated region
        $region77: #{tpu_custom_call.1} parent=51 // pred_check
          %p1602 = pneg %p229
        $region78: #{tpu_custom_call.1} parent=51 // pred_check_branch
          %1604 = sbr.rel (%p1602) target = $region80
        $region79: #{tpu_custom_call.1} parent=51 // pred_region
          %s1606 = ssub.s32 128, 128
          %1607 = vsyncadd %s1593, %s1606
          %s1608 = smul.addr %s33, 128
          %s1609 = scalar_lea.hbm %s8, %s1608
          %s1611 = sshll.u32 %s1596, 4
          %s1612 = int_to_ptr.vmem [resolvable:$true] %s1611
          %1614 = dma.vmem_to_hbm [thread:$0]  %s1612, 128, %s1609, %s1593
        $region80: #{tpu_custom_call.1} parent=51 // pred_fallthru
          _
        // Predicated region
        $region81: #{tpu_custom_call.1} parent=51 // pred_check
          %p1615 = pneg %p255
        $region82: #{tpu_custom_call.1} parent=51 // pred_check_branch
          %1617 = sbr.rel (%p1615) target = $region84
        $region83: #{tpu_custom_call.1} parent=51 // pred_region
          %s1619 = ssub.s32 512, 512
          %1620 = vsyncadd %s1598, %s1619
          %s1621 = smul.addr %s33, 4
          %s1622 = smul.addr %s1621, 128
          %s1623 = scalar_lea.hbm %s9, %s1622
          %s1624 = sshll.u32 %s1601, 4
          %s1625 = int_to_ptr.vmem [resolvable:$true] %s1624
          %1630 = dma.vmem_to_hbm [thread:$0]  %s1625, 512, %s1623, %s1598, 128, 128, 8
        $region84: #{tpu_custom_call.1} parent=51 // pred_fallthru
          _
      $region52: #{tpu_custom_call.1} parent=5 // pred_fallthru
        _
      %p1631 = scmp.le.s32.totalorder 2, %s28
      // Predicated region
      $region85: #{tpu_custom_call.1} parent=5 // pred_check
        %p1632 = pneg %p1631
      $region86: #{tpu_custom_call.1} parent=5 // pred_check_branch
        %1634 = sbr.rel (%p1632) target = $region88
      $region87: #{tpu_custom_call.1} parent=5 // pred_region
        %s1635 = ssub.s32 %s28, 2
        // Predicated region
        $region89: #{tpu_custom_call.1} parent=87 // pred_check
          %p1636 = pneg %p235
        $region90: #{tpu_custom_call.1} parent=87 // pred_check_branch
          %1638 = sbr.rel (%p1636) target = $region92
        $region91: #{tpu_custom_call.1} parent=87 // pred_region
          %s1639 = sand.u32 %s220, 1
          %s1640 = scalar_lea.sflag [#allocation4], %s1639
          %s1641 = sand.u32 %s220, 1
          %s1642 = smul.addr %s1641, 8
          %s1643 = scalar_lea.vmem [#allocation13], %s1642
          %1644 = dma.done %s1640, 128
        $region92: #{tpu_custom_call.1} parent=87 // pred_fallthru
          _
        // Predicated region
        $region93: #{tpu_custom_call.1} parent=87 // pred_check
          %p1645 = pneg %p261
        $region94: #{tpu_custom_call.1} parent=87 // pred_check_branch
          %1647 = sbr.rel (%p1645) target = $region96
        $region95: #{tpu_custom_call.1} parent=87 // pred_region
          %s1648 = sand.u32 %s246, 1
          %s1649 = scalar_lea.sflag [#allocation15], %s1648
          %s1650 = sand.u32 %s246, 1
          %s1651 = smul.addr %s1650, 32
          %s1652 = scalar_lea.vmem [#allocation14], %s1651
          %1653 = dma.done %s1649, 512
        $region96: #{tpu_custom_call.1} parent=87 // pred_fallthru
          _
      $region88: #{tpu_custom_call.1} parent=5 // pred_fallthru
        _
    $region6: #{tpu_custom_call.1} parent=1 // loop_footer
      %s32 = sadd.s32 1, %s28
    $region7: #{tpu_custom_call.1} parent=1 // loop_footer_branch
      %27 = sbr.rel target = $region3
    $region8: #{tpu_custom_call.1} parent=1 // loop_exit
      _
    %1654 = vsyncpa [#allocation3], 1
    %s1655 = scalar_lea.sflag [#allocation3], 1
    %1656 = vsyncpa %s1655, 1
    %1657 = vsyncpa [#allocation6], 1
    %1658 = vsyncpa [#allocation9], 1
    %1659 = vsyncpa [#allocation12], 1
    %1660 = vsyncpa [#allocation4], 1
    %s1661 = scalar_lea.sflag [#allocation4], 1
    %1662 = vsyncpa %s1661, 1
    %1663 = vsyncpa [#allocation15], 1
    %s1664 = scalar_lea.sflag [#allocation15], 1
    %1665 = vsyncpa %s1664, 1

</llo_original>
